<compile_context>
chip_gen: v5e
topology: v5e:2x2
jax: 0.10.0
libtpu: 0.0.40
codegen_flags: <defaults>
</compile_context>

<pallas_src>
import functools

import jax
import jax.numpy as jnp
from jax.experimental import pallas as pl
from jax.experimental.pallas import tpu as pltpu

CIN_PAD = 16        # input channels padded to one bf16 sublane tile
C1 = 32             # initial conv1 output channels (real width, no padding)
C2 = 64             # hidden width of all remaining hidden layers (real width)
COUT_PAD = 8        # rows allocated for the final (1 real output channel) weight
BN_EPS = 1e-5
TP_CHOICES = (8192, 4096, 2048, 1024, 512, 256)   # pixel-tile candidates (mult. of 128)


# ---------------------------------------------------------------------------
# Kernel
# ---------------------------------------------------------------------------
def cnn1_kernel(x_ref,
                w1, b1, w2, b2, w3, b3, w4, b4, w5, b5, w6, b6,
                o_ref, *, bf16_elemwise):
    x = x_ref[...]                                           # (CIN_PAD, tp) bf16

    def mm(w_ref, h):                                        # MXU matmul, f32 acc
        return jnp.dot(w_ref[...], h, preferred_element_type=jnp.float32)

    relu = lambda v: jnp.maximum(v, 0.0)

    if bf16_elemwise:
        # v6e / v7x: bf16 VPU -> cast to bf16 before ReLU and do the residual add in
        # bf16 (half the VALU issues, half the live residual footprint).
        # relu(bf16(x)) == bf16(relu(x)) exactly, so only the residual add loses bits.
        act = lambda w, h, b: relu((mm(w, h) + b[...]).astype(jnp.bfloat16))
        h1 = act(w1, x, b1)                                              # (C1, tp) bf16
        h2 = act(w2, h1, b2)                                             # (C2, tp) bf16
        h3 = act(w3, h2, b3)
        h4 = relu((mm(w4, h3) + b4[...]).astype(jnp.bfloat16) + h2)      # residual
        h5 = act(w5, h4, b5)
    else:
        # v5e: no bf16 VALU -> keep elementwise math in f32, single trailing cast.
        act = lambda w, h, b: relu(mm(w, h) + b[...])
        h1 = act(w1, x, b1).astype(jnp.bfloat16)
        h2f = act(w2, h1, b2)                                            # f32 residual
        h2 = h2f.astype(jnp.bfloat16)
        h3 = act(w3, h2, b3).astype(jnp.bfloat16)
        h4 = relu(mm(w4, h3) + b4[...] + h2f).astype(jnp.bfloat16)
        h5 = act(w5, h4, b5).astype(jnp.bfloat16)

    # Final 1x1 conv -> Hardtanh(-400, 400): bias/clip only on the single real row,
    # then a lane-dense (1, tp) f32 store (4 B/pixel).
    y = mm(w6, h5)                                           # (COUT_PAD, tp) f32
    y0 = y[0:1, :] + b6[...]                                 # (1, tp) f32
    o_ref[...] = jnp.clip(y0, -400.0, 400.0)


# ---------------------------------------------------------------------------
# Parameter construction / packing (glue, runs once)
# ---------------------------------------------------------------------------
def fold_bn(w, b, gamma, beta, mean, var):
    """Fold eval-mode BatchNorm into the preceding 1x1 conv (w: (Cout,Cin), b: (Cout,))."""
    scale = gamma / jnp.sqrt(var + BN_EPS)
    return w * scale[:, None], (b - mean) * scale + beta


def init_params(key, shape_x):
    """Deterministic synthetic parameters matching CNN1(shapeX)'s layer shapes."""
    dims = [(shape_x, 32), (32, 64), (64, 64), (64, 64), (64, 64), (64, 1)]
    has_bn = [True, True, True, True, True, False]
    params = []
    for (cin, cout), bn in zip(dims, has_bn):
        key, kw, kb, kg, kbe, km, kv = jax.random.split(key, 7)
        bound = 1.0 / jnp.sqrt(float(cin))
        w = jax.random.uniform(kw, (cout, cin), jnp.float32, -bound, bound)
        b = jax.random.uniform(kb, (cout,), jnp.float32, -bound, bound)
        if bn:
            gamma = 1.0 + 0.1 * jax.random.normal(kg, (cout,), jnp.float32)
            beta = 0.1 * jax.random.normal(kbe, (cout,), jnp.float32)
            mean = 0.1 * jax.random.normal(km, (cout,), jnp.float32)
            var = jnp.abs(jax.random.normal(kv, (cout,), jnp.float32)) + 0.5
            w, b = fold_bn(w, b, gamma, beta, mean, var)
        params.append((w, b))
    return params


def _pad_w(w, rows, cols):
    out = jnp.zeros((rows, cols), jnp.float32).at[: w.shape[0], : w.shape[1]].set(w)
    return out.astype(jnp.bfloat16)


def _col(b, rows=None):
    rows = b.shape[0] if rows is None else rows
    return jnp.zeros((rows, 1), jnp.float32).at[: b.shape[0], 0].set(b)


def pack_params(params):
    """Pack folded (Cout, Cin) weights/biases at their real widths for the kernel."""
    (w1, b1), (w2, b2), (w3, b3), (w4, b4), (w5, b5), (w6, b6) = params
    return (
        _pad_w(w1, C1, CIN_PAD),        _col(b1),       # (32, 16), (32, 1)
        w2.astype(jnp.bfloat16),        _col(b2),       # (64, 32), (64, 1)
        w3.astype(jnp.bfloat16),        _col(b3),       # (64, 64), (64, 1)
        w4.astype(jnp.bfloat16),        _col(b4),       # (64, 64), (64, 1)
        w5.astype(jnp.bfloat16),        _col(b5),       # (64, 64), (64, 1)
        _pad_w(w6, COUT_PAD, C2),       _col(b6, 1),    # (8, 64),  (1, 1)
    )


# ---------------------------------------------------------------------------
# Wrapper
# ---------------------------------------------------------------------------
def _device_kind():
    try:
        return jax.devices()[0].device_kind.lower()
    except Exception:
        return ""


def _use_bf16_elemwise(kind):
    # bf16 VPU exists on v6e / v7x; avoid bf16 elementwise on v5e and older.
    return ("v6" in kind) or ("v7" in kind) or ("7x" in kind)


def _is_v7x(kind):
    return ("v7" in kind) or ("7x" in kind)


def _pick_tile(p):
    # Weights are resident (constant index_maps) and per-step input DMA is only
    # ~32 B/pixel, so prefer the largest tile that still gives >= 2 grid steps.
    for tp in TP_CHOICES:
        if p >= 2 * tp:
            return tp
    return 128


@jax.jit
def cnn1_forward(x_nchw, packed_params):
    n, c, h, w = x_nchw.shape
    p = n * h * w
    tp = _pick_tile(p)
    n_tiles = pl.cdiv(p, tp)

    kind = _device_kind()
    if _is_v7x(kind) and n_tiles > 1 and n_tiles % 2 == 1:
        n_tiles += 1              # 2 TensorCores share the parallel axis -> even split
    p_pad = n_tiles * tp

    # NCHW -> (C, P) channel-major (pixels on the lane axis); under jit XLA fuses the
    # transpose + bf16 cast + pad into a single HBM pass (~32 B/pixel kernel input,
    # 4 B/pixel kernel output).
    # TODO(synk): accept channel-major / NHWC input directly when the caller can provide it.
    x_cp = jnp.transpose(x_nchw, (1, 0, 2, 3)).reshape(c, p).astype(jnp.bfloat16)
    x_in = jnp.pad(x_cp, ((0, CIN_PAD - c), (0, p_pad - p)))

    in_specs = [pl.BlockSpec((CIN_PAD, tp), lambda i: (0, i))]
    # Weights/biases: full-array blocks with constant index_maps -> stay VMEM-resident.
    in_specs += [pl.BlockSpec(prm.shape, lambda i: (0, 0)) for prm in packed_params]

    kernel = functools.partial(cnn1_kernel, bf16_elemwise=_use_bf16_elemwise(kind))

    out = pl.pallas_call(
        kernel,
        out_shape=jax.ShapeDtypeStruct((1, p_pad), jnp.float32),
        grid_spec=pltpu.PrefetchScalarGridSpec(
            num_scalar_prefetch=0,
            grid=(n_tiles,),
            in_specs=in_specs,
            out_specs=pl.BlockSpec((1, tp), lambda i: (0, i)),
        ),
        compiler_params=pltpu.CompilerParams(
            dimension_semantics=("parallel",),
            # Live footprint even at tp=8192 is a few MiB (real channel widths, bf16
            # activations); 32 MiB leaves headroom on every generation incl. v7x (64 MiB).
            vmem_limit_bytes=32 * 1024 * 1024,
        ),
    )(x_in, *packed_params)

    y = out[0, :p].reshape(n, h, w)
    return y[:, None, :, :]       # back to NCHW: (N, 1, H, W)


# ---------------------------------------------------------------------------
# Plain-JAX reference (for sanity check)
# ---------------------------------------------------------------------------
def reference_forward(x_nchw, params):
    n, c, h, w = x_nchw.shape
    x = jnp.transpose(x_nchw, (0, 2, 3, 1)).reshape(-1, c).astype(jnp.float32)

    def lin(h_, wp, bp):
        return h_ @ wp.T + bp

    (w1, b1), (w2, b2), (w3, b3), (w4, b4), (w5, b5), (w6, b6) = params
    h1 = jnp.maximum(lin(x, w1, b1), 0.0)
    h2 = jnp.maximum(lin(h1, w2, b2), 0.0)
    h3 = jnp.maximum(lin(h2, w3, b3), 0.0)
    h4 = jnp.maximum(lin(h3, w4, b4) + h2, 0.0)
    h5 = jnp.maximum(lin(h4, w5, b5), 0.0)
    y = jnp.clip(lin(h5, w6, b6), -400.0, 400.0)
    return jnp.transpose(y.reshape(n, h, w, 1), (0, 3, 1, 2))


if __name__ == "__main__":
    SHAPE_X = 4   # input channels (shapeX)
    N, H, W = 2, 16, 16

    key = jax.random.PRNGKey(0)
    key, kx = jax.random.split(key)
    x = jax.random.normal(kx, (N, SHAPE_X, H, W), jnp.float32)

    params = init_params(key, SHAPE_X)
    packed = pack_params(params)

    y = cnn1_forward(x, packed)
    jax.block_until_ready(y)

    # Reference uses the same bf16-rounded weights the kernel sees (f32 activations);
    # bf16 intermediate activations on v6e/v7x add a small, tolerated deviation.
    params_bf16 = [(w.astype(jnp.bfloat16).astype(jnp.float32), b) for w, b in params]
    y_ref = reference_forward(x, params_bf16)

    assert y.shape == (N, 1, H, W)
    assert jnp.allclose(y, y_ref, atol=0.2, rtol=0.05), float(jnp.max(jnp.abs(y - y_ref)))

    print("KERNEL_OK")
</pallas_src>

<mosaic_0001>
module attributes {stable_mosaic.version = 11 : i64} {
  func.func @cnn1_kernel(%arg0: i32, %arg1: memref<16x256xbf16, #tpu.memory_space<vmem>>, %arg2: memref<32x16xbf16, #tpu.memory_space<vmem>>, %arg3: memref<32x1xf32, #tpu.memory_space<vmem>>, %arg4: memref<64x32xbf16, #tpu.memory_space<vmem>>, %arg5: memref<64x1xf32, #tpu.memory_space<vmem>>, %arg6: memref<64x64xbf16, #tpu.memory_space<vmem>>, %arg7: memref<64x1xf32, #tpu.memory_space<vmem>>, %arg8: memref<64x64xbf16, #tpu.memory_space<vmem>>, %arg9: memref<64x1xf32, #tpu.memory_space<vmem>>, %arg10: memref<64x64xbf16, #tpu.memory_space<vmem>>, %arg11: memref<64x1xf32, #tpu.memory_space<vmem>>, %arg12: memref<8x64xbf16, #tpu.memory_space<vmem>>, %arg13: memref<1x1xf32, #tpu.memory_space<vmem>>, %arg14: memref<1x256xf32, #tpu.memory_space<vmem>>) attributes {dimension_semantics = [#tpu.dimension_semantics<parallel>], iteration_bounds = array<i64: 2>, scalar_prefetch = 0 : i64, scratch_operands = 0 : i64, tpu.core_type = #tpu.core_type<tc>, window_params = [{transform_indices = @transform_0, window_bounds = array<i64: 16, 256>}, {pipeline_mode = #tpu.pipeline_mode<synchronous>, transform_indices = @transform_1, window_bounds = array<i64: 32, 16>}, {pipeline_mode = #tpu.pipeline_mode<synchronous>, transform_indices = @transform_2, window_bounds = array<i64: 32, 1>}, {pipeline_mode = #tpu.pipeline_mode<synchronous>, transform_indices = @transform_3, window_bounds = array<i64: 64, 32>}, {pipeline_mode = #tpu.pipeline_mode<synchronous>, transform_indices = @transform_4, window_bounds = array<i64: 64, 1>}, {pipeline_mode = #tpu.pipeline_mode<synchronous>, transform_indices = @transform_5, window_bounds = array<i64: 64, 64>}, {pipeline_mode = #tpu.pipeline_mode<synchronous>, transform_indices = @transform_6, window_bounds = array<i64: 64, 1>}, {pipeline_mode = #tpu.pipeline_mode<synchronous>, transform_indices = @transform_7, window_bounds = array<i64: 64, 64>}, {pipeline_mode = #tpu.pipeline_mode<synchronous>, transform_indices = @transform_8, window_bounds = array<i64: 64, 1>}, {pipeline_mode = #tpu.pipeline_mode<synchronous>, transform_indices = @transform_9, window_bounds = array<i64: 64, 64>}, {pipeline_mode = #tpu.pipeline_mode<synchronous>, transform_indices = @transform_10, window_bounds = array<i64: 64, 1>}, {pipeline_mode = #tpu.pipeline_mode<synchronous>, transform_indices = @transform_11, window_bounds = array<i64: 8, 64>}, {pipeline_mode = #tpu.pipeline_mode<synchronous>, transform_indices = @transform_12, window_bounds = array<i64: 1, 1>}, {transform_indices = @transform_13, window_bounds = array<i64: 1, 256>}]} {
    %c0 = arith.constant 0 : index
    %c0_0 = arith.constant 0 : index
    %0 = vector.load %arg1[%c0, %c0_0] : memref<16x256xbf16, #tpu.memory_space<vmem>>, vector<16x256xbf16>
    %c0_1 = arith.constant 0 : index
    %c0_2 = arith.constant 0 : index
    %1 = vector.load %arg2[%c0_1, %c0_2] : memref<32x16xbf16, #tpu.memory_space<vmem>>, vector<32x16xbf16>
    %cst = arith.constant dense<0.000000e+00> : vector<32x256xf32>
    %2 = tpu.matmul %1, %0, %cst {dimension_numbers = #tpu.dot_dimension_numbers<[1], [0], [0], [1], [0, 0, 1, 1], [], []>} : vector<32x16xbf16>, vector<16x256xbf16>, vector<32x256xf32> -> vector<32x256xf32>
    %c0_3 = arith.constant 0 : index
    %c0_4 = arith.constant 0 : index
    %3 = vector.load %arg3[%c0_3, %c0_4] : memref<32x1xf32, #tpu.memory_space<vmem>>, vector<32x1xf32>
    %4 = vector.broadcast %3 : vector<32x1xf32> to vector<32x256xf32>
    %5 = arith.addf %2, %4 : vector<32x256xf32>
    %cst_5 = arith.constant 0.000000e+00 : f32
    %6 = vector.broadcast %cst_5 : f32 to vector<32x256xf32>
    %7 = arith.maximumf %5, %6 : vector<32x256xf32>
    %8 = arith.truncf %7 : vector<32x256xf32> to vector<32x256xbf16>
    %c0_6 = arith.constant 0 : index
    %c0_7 = arith.constant 0 : index
    %9 = vector.load %arg4[%c0_6, %c0_7] : memref<64x32xbf16, #tpu.memory_space<vmem>>, vector<64x32xbf16>
    %cst_8 = arith.constant dense<0.000000e+00> : vector<64x256xf32>
    %10 = tpu.matmul %9, %8, %cst_8 {dimension_numbers = #tpu.dot_dimension_numbers<[1], [0], [0], [1], [0, 0, 1, 1], [], []>} : vector<64x32xbf16>, vector<32x256xbf16>, vector<64x256xf32> -> vector<64x256xf32>
    %c0_9 = arith.constant 0 : index
    %c0_10 = arith.constant 0 : index
    %11 = vector.load %arg5[%c0_9, %c0_10] : memref<64x1xf32, #tpu.memory_space<vmem>>, vector<64x1xf32>
    %12 = vector.broadcast %11 : vector<64x1xf32> to vector<64x256xf32>
    %13 = arith.addf %10, %12 : vector<64x256xf32>
    %cst_11 = arith.constant 0.000000e+00 : f32
    %14 = vector.broadcast %cst_11 : f32 to vector<64x256xf32>
    %15 = arith.maximumf %13, %14 : vector<64x256xf32>
    %16 = arith.truncf %15 : vector<64x256xf32> to vector<64x256xbf16>
    %c0_12 = arith.constant 0 : index
    %c0_13 = arith.constant 0 : index
    %17 = vector.load %arg6[%c0_12, %c0_13] : memref<64x64xbf16, #tpu.memory_space<vmem>>, vector<64x64xbf16>
    %cst_14 = arith.constant dense<0.000000e+00> : vector<64x256xf32>
    %18 = tpu.matmul %17, %16, %cst_14 {dimension_numbers = #tpu.dot_dimension_numbers<[1], [0], [0], [1], [0, 0, 1, 1], [], []>} : vector<64x64xbf16>, vector<64x256xbf16>, vector<64x256xf32> -> vector<64x256xf32>
    %c0_15 = arith.constant 0 : index
    %c0_16 = arith.constant 0 : index
    %19 = vector.load %arg7[%c0_15, %c0_16] : memref<64x1xf32, #tpu.memory_space<vmem>>, vector<64x1xf32>
    %20 = vector.broadcast %19 : vector<64x1xf32> to vector<64x256xf32>
    %21 = arith.addf %18, %20 : vector<64x256xf32>
    %cst_17 = arith.constant 0.000000e+00 : f32
    %22 = vector.broadcast %cst_17 : f32 to vector<64x256xf32>
    %23 = arith.maximumf %21, %22 : vector<64x256xf32>
    %24 = arith.truncf %23 : vector<64x256xf32> to vector<64x256xbf16>
    %c0_18 = arith.constant 0 : index
    %c0_19 = arith.constant 0 : index
    %25 = vector.load %arg8[%c0_18, %c0_19] : memref<64x64xbf16, #tpu.memory_space<vmem>>, vector<64x64xbf16>
    %cst_20 = arith.constant dense<0.000000e+00> : vector<64x256xf32>
    %26 = tpu.matmul %25, %24, %cst_20 {dimension_numbers = #tpu.dot_dimension_numbers<[1], [0], [0], [1], [0, 0, 1, 1], [], []>} : vector<64x64xbf16>, vector<64x256xbf16>, vector<64x256xf32> -> vector<64x256xf32>
    %c0_21 = arith.constant 0 : index
    %c0_22 = arith.constant 0 : index
    %27 = vector.load %arg9[%c0_21, %c0_22] : memref<64x1xf32, #tpu.memory_space<vmem>>, vector<64x1xf32>
    %28 = vector.broadcast %27 : vector<64x1xf32> to vector<64x256xf32>
    %29 = arith.addf %26, %28 : vector<64x256xf32>
    %30 = arith.addf %29, %15 : vector<64x256xf32>
    %cst_23 = arith.constant 0.000000e+00 : f32
    %31 = vector.broadcast %cst_23 : f32 to vector<64x256xf32>
    %32 = arith.maximumf %30, %31 : vector<64x256xf32>
    %33 = arith.truncf %32 : vector<64x256xf32> to vector<64x256xbf16>
    %c0_24 = arith.constant 0 : index
    %c0_25 = arith.constant 0 : index
    %34 = vector.load %arg10[%c0_24, %c0_25] : memref<64x64xbf16, #tpu.memory_space<vmem>>, vector<64x64xbf16>
    %cst_26 = arith.constant dense<0.000000e+00> : vector<64x256xf32>
    %35 = tpu.matmul %34, %33, %cst_26 {dimension_numbers = #tpu.dot_dimension_numbers<[1], [0], [0], [1], [0, 0, 1, 1], [], []>} : vector<64x64xbf16>, vector<64x256xbf16>, vector<64x256xf32> -> vector<64x256xf32>
    %c0_27 = arith.constant 0 : index
    %c0_28 = arith.constant 0 : index
    %36 = vector.load %arg11[%c0_27, %c0_28] : memref<64x1xf32, #tpu.memory_space<vmem>>, vector<64x1xf32>
    %37 = vector.broadcast %36 : vector<64x1xf32> to vector<64x256xf32>
    %38 = arith.addf %35, %37 : vector<64x256xf32>
    %cst_29 = arith.constant 0.000000e+00 : f32
    %39 = vector.broadcast %cst_29 : f32 to vector<64x256xf32>
    %40 = arith.maximumf %38, %39 : vector<64x256xf32>
    %41 = arith.truncf %40 : vector<64x256xf32> to vector<64x256xbf16>
    %c0_30 = arith.constant 0 : index
    %c0_31 = arith.constant 0 : index
    %42 = vector.load %arg12[%c0_30, %c0_31] : memref<8x64xbf16, #tpu.memory_space<vmem>>, vector<8x64xbf16>
    %cst_32 = arith.constant dense<0.000000e+00> : vector<8x256xf32>
    %43 = tpu.matmul %42, %41, %cst_32 {dimension_numbers = #tpu.dot_dimension_numbers<[1], [0], [0], [1], [0, 0, 1, 1], [], []>} : vector<8x64xbf16>, vector<64x256xbf16>, vector<8x256xf32> -> vector<8x256xf32>
    %44 = vector.extract_strided_slice %43 {offsets = [0, 0], sizes = [1, 256], strides = [1, 1]} : vector<8x256xf32> to vector<1x256xf32>
    %c0_33 = arith.constant 0 : index
    %c0_34 = arith.constant 0 : index
    %45 = vector.load %arg13[%c0_33, %c0_34] : memref<1x1xf32, #tpu.memory_space<vmem>>, vector<1x1xf32>
    %46 = vector.broadcast %45 : vector<1x1xf32> to vector<1x256xf32>
    %47 = arith.addf %44, %46 : vector<1x256xf32>
    %cst_35 = arith.constant -4.000000e+02 : f32
    %cst_36 = arith.constant 4.000000e+02 : f32
    %48 = vector.broadcast %cst_35 : f32 to vector<1x256xf32>
    %49 = arith.maximumf %48, %47 : vector<1x256xf32>
    %50 = vector.broadcast %cst_36 : f32 to vector<1x256xf32>
    %51 = arith.minimumf %50, %49 : vector<1x256xf32>
    %c0_37 = arith.constant 0 : index
    %c0_38 = arith.constant 0 : index
    %52 = vector.load %arg14[%c0_37, %c0_38] : memref<1x256xf32, #tpu.memory_space<vmem>>, vector<1x256xf32>
    tpu.vector_store %arg14[%c0_37, %c0_38], %51 {strides = array<i32>} : memref<1x256xf32, #tpu.memory_space<vmem>>, vector<1x256xf32>,
    return
  }
  func.func @transform_0(%arg0: i32) -> (i32, i32) {
    %c0_i32 = arith.constant 0 : i32
    %c0_i32_0 = arith.constant 0 : i32
    return %c0_i32, %arg0 : i32, i32
  }
  func.func @transform_1(%arg0: i32) -> (i32, i32) {
    %c0_i32 = arith.constant 0 : i32
    %c0_i32_0 = arith.constant 0 : i32
    %c0_i32_1 = arith.constant 0 : i32
    return %c0_i32, %c0_i32_0 : i32, i32
  }
  func.func @transform_2(%arg0: i32) -> (i32, i32) {
    %c0_i32 = arith.constant 0 : i32
    %c0_i32_0 = arith.constant 0 : i32
    %c0_i32_1 = arith.constant 0 : i32
    return %c0_i32, %c0_i32_0 : i32, i32
  }
  func.func @transform_3(%arg0: i32) -> (i32, i32) {
    %c0_i32 = arith.constant 0 : i32
    %c0_i32_0 = arith.constant 0 : i32
    %c0_i32_1 = arith.constant 0 : i32
    return %c0_i32, %c0_i32_0 : i32, i32
  }
  func.func @transform_4(%arg0: i32) -> (i32, i32) {
    %c0_i32 = arith.constant 0 : i32
    %c0_i32_0 = arith.constant 0 : i32
    %c0_i32_1 = arith.constant 0 : i32
    return %c0_i32, %c0_i32_0 : i32, i32
  }
  func.func @transform_5(%arg0: i32) -> (i32, i32) {
    %c0_i32 = arith.constant 0 : i32
    %c0_i32_0 = arith.constant 0 : i32
    %c0_i32_1 = arith.constant 0 : i32
    return %c0_i32, %c0_i32_0 : i32, i32
  }
  func.func @transform_6(%arg0: i32) -> (i32, i32) {
    %c0_i32 = arith.constant 0 : i32
    %c0_i32_0 = arith.constant 0 : i32
    %c0_i32_1 = arith.constant 0 : i32
    return %c0_i32, %c0_i32_0 : i32, i32
  }
  func.func @transform_7(%arg0: i32) -> (i32, i32) {
    %c0_i32 = arith.constant 0 : i32
    %c0_i32_0 = arith.constant 0 : i32
    %c0_i32_1 = arith.constant 0 : i32
    return %c0_i32, %c0_i32_0 : i32, i32
  }
  func.func @transform_8(%arg0: i32) -> (i32, i32) {
    %c0_i32 = arith.constant 0 : i32
    %c0_i32_0 = arith.constant 0 : i32
    %c0_i32_1 = arith.constant 0 : i32
    return %c0_i32, %c0_i32_0 : i32, i32
  }
  func.func @transform_9(%arg0: i32) -> (i32, i32) {
    %c0_i32 = arith.constant 0 : i32
    %c0_i32_0 = arith.constant 0 : i32
    %c0_i32_1 = arith.constant 0 : i32
    return %c0_i32, %c0_i32_0 : i32, i32
  }
  func.func @transform_10(%arg0: i32) -> (i32, i32) {
    %c0_i32 = arith.constant 0 : i32
    %c0_i32_0 = arith.constant 0 : i32
    %c0_i32_1 = arith.constant 0 : i32
    return %c0_i32, %c0_i32_0 : i32, i32
  }
  func.func @transform_11(%arg0: i32) -> (i32, i32) {
    %c0_i32 = arith.constant 0 : i32
    %c0_i32_0 = arith.constant 0 : i32
    %c0_i32_1 = arith.constant 0 : i32
    return %c0_i32, %c0_i32_0 : i32, i32
  }
  func.func @transform_12(%arg0: i32) -> (i32, i32) {
    %c0_i32 = arith.constant 0 : i32
    %c0_i32_0 = arith.constant 0 : i32
    %c0_i32_1 = arith.constant 0 : i32
    return %c0_i32, %c0_i32_0 : i32, i32
  }
  func.func @transform_13(%arg0: i32) -> (i32, i32) {
    %c0_i32 = arith.constant 0 : i32
    %c0_i32_0 = arith.constant 0 : i32
    return %c0_i32, %arg0 : i32, i32
  }
}

</mosaic_0001>

<llo_original>
// kernel: squeeze.1
$region0: #{squeeze.1}
  %s0 = inlined_call_operand.vmem [shape: f32[512], index: 0, kind: input, shape index: {}]
  %s1 = inlined_call_operand.hbm [shape: f32[2,1,16,16], index: 1, kind: output, shape index: {}]
  $region1: #{squeeze.1} parent=0
    #allocation0 [shape = 'u8[16384]{0}', space=vmem, size = 0x4000, scoped, tag = 'operand span for operand 1']
    #allocation1 [shape = 's32[1]{0}', space=sflag, size = 0x4, scoped, tag = 'scoped memory for squeeze.1']
    #allocation2 [shape = 'u8[4096]{0}', space=vmem, size = 0x1000, scoped, tag = 'scoped mem for input reshape']
    %2 = vsyncpa [#allocation1], 0
    %s4 = ssub.s32 16, 1
    %v5 = vld [vmem:[%s0] sm:%s4]
    %6 = vst [vmem:[#allocation2] sm:%s4] %v5
    %v7 = vld [vmem:[#allocation2] sm:$0xf]
    %vm8 = vcmask 130048
    %9 = vst.msk [vmem:[#allocation0] ss:$8 sm:$0xf] %vm8, %v7
    %v10 = vld [vmem:[#allocation2] sm:$0xf]
    %11 = vrot.lane.b32.xlu0 %v10, 112
    %v12 = vpop.permute.xlu0 %11
    %vm13 = vcmask 130048
    %s14 = scalar_lea.vmem [#allocation0], 1
    %15 = vst.msk [vmem:[%s14] ss:$8 sm:$0xf] %vm13, %v12
    %v16 = vld [vmem:[#allocation2] sm:$0xf]
    %17 = vrot.lane.b32.xlu0 %v16, 96
    %v18 = vpop.permute.xlu0 %17
    %vm19 = vcmask 130048
    %s20 = scalar_lea.vmem [#allocation0], 2
    %21 = vst.msk [vmem:[%s20] ss:$8 sm:$0xf] %vm19, %v18
    %v22 = vld [vmem:[#allocation2] sm:$0xf]
    %23 = vrot.lane.b32.xlu0 %v22, 80
    %v24 = vpop.permute.xlu0 %23
    %vm25 = vcmask 130048
    %s26 = scalar_lea.vmem [#allocation0], 3
    %27 = vst.msk [vmem:[%s26] ss:$8 sm:$0xf] %vm25, %v24
    %v28 = vld [vmem:[#allocation2] sm:$0xf]
    %29 = vrot.lane.b32.xlu0 %v28, 64
    %v30 = vpop.permute.xlu0 %29
    %vm31 = vcmask 130048
    %s32 = scalar_lea.vmem [#allocation0], 4
    %33 = vst.msk [vmem:[%s32] ss:$8 sm:$0xf] %vm31, %v30
    %v34 = vld [vmem:[#allocation2] sm:$0xf]
    %35 = vrot.lane.b32.xlu0 %v34, 48
    %v36 = vpop.permute.xlu0 %35
    %vm37 = vcmask 130048
    %s38 = scalar_lea.vmem [#allocation0], 5
    %39 = vst.msk [vmem:[%s38] ss:$8 sm:$0xf] %vm37, %v36
    %v40 = vld [vmem:[#allocation2] sm:$0xf]
    %41 = vrot.lane.b32.xlu0 %v40, 32
    %v42 = vpop.permute.xlu0 %41
    %vm43 = vcmask 130048
    %s44 = scalar_lea.vmem [#allocation0], 6
    %45 = vst.msk [vmem:[%s44] ss:$8 sm:$0xf] %vm43, %v42
    %v46 = vld [vmem:[#allocation2] sm:$0xf]
    %47 = vrot.lane.b32.xlu0 %v46, 16
    %v48 = vpop.permute.xlu0 %47
    %vm49 = vcmask 130048
    %s50 = scalar_lea.vmem [#allocation0], 7
    %51 = vst.msk [vmem:[%s50] ss:$8 sm:$0xf] %vm49, %v48
    %53 = vsyncadd [#allocation1], 0
    %s55 = sshll.u32 [#allocation0], 4
    %s56 = int_to_ptr.vmem [resolvable:$true] %s55
    %s57 = sshll.u32 %s1, 4
    %s58 = int_to_ptr.hbm [resolvable:$true] %s57
    %60 = dma.vmem_to_hbm [thread:$0]  %s56, 512, %s58, [#allocation1]
    %62 = dma.done [#allocation1], 512
    %63 = vsyncpa [#allocation1], 1

// kernel: cnn1_forward.1
$region0: #{cnn1_forward.1}
  #allocation0 [shape = 'u32[]', space=smem, size = 0x4, offset = 0x4, fixed_abs, tag = 'smem constant byte address 0x4 - core index']
  #allocation1 [shape = 'u32[72,128]{1,0:T(1,128)}', space=vmem, size = 0x9000, scoped, tag = 'internal scratch']
  #allocation2 [shape = 'f32[1,1]{1,0:T(1,128)S(1)}', space=vmem, size = 0x200, scoped, tag = 'scoped memory for cnn1_forward.1']
  %s0 = inlined_call_operand.vmem [shape: bf16[16,512], index: 0, kind: input, shape index: {}]
  %s1 = inlined_call_operand.vmem [shape: bf16[32,16], index: 1, kind: input, shape index: {}]
  %s2 = inlined_call_operand.vmem [shape: f32[32,1], index: 2, kind: input, shape index: {}]
  %s3 = inlined_call_operand.vmem [shape: bf16[64,32], index: 3, kind: input, shape index: {}]
  %s4 = inlined_call_operand.vmem [shape: f32[64,1], index: 4, kind: input, shape index: {}]
  %s5 = inlined_call_operand.vmem [shape: bf16[64,64], index: 5, kind: input, shape index: {}]
  %s6 = inlined_call_operand.vmem [shape: f32[64,1], index: 6, kind: input, shape index: {}]
  %s7 = inlined_call_operand.vmem [shape: bf16[64,64], index: 7, kind: input, shape index: {}]
  %s8 = inlined_call_operand.vmem [shape: f32[64,1], index: 8, kind: input, shape index: {}]
  %s9 = inlined_call_operand.vmem [shape: bf16[64,64], index: 9, kind: input, shape index: {}]
  %s10 = inlined_call_operand.vmem [shape: f32[64,1], index: 10, kind: input, shape index: {}]
  %s11 = inlined_call_operand.vmem [shape: bf16[8,64], index: 11, kind: input, shape index: {}]
  %s12 = inlined_call_operand.<no memory space> [shape: f32[1,1], index: 12, kind: input, shape index: {}]
  %s13 = inlined_call_operand.vmem [shape: f32[1,512], index: 13, kind: output, shape index: {}]
  %s14 = sld [smem:[#allocation0]]
  $region123: #{cnn1_forward.1} parent=0
    _
  %s16 = ssub.s32 1, %s14
  %s17 = scalar_select 0, %s16, %s14
  %v18 = vstv %s12
  %19 = vst [vmem:[#allocation2] sm:$0x1] %v18
  $region1: #{cnn1_forward.1} parent=0
    #allocation3 [shape = 'u8[16384]{0}', space=vmem, size = 0x4000, scoped, tag = 'input window, operand 0']
    loop: start=0, step=1, limit=4
    $region2: #{cnn1_forward.1} parent=1 // loop_pre_header
      _
    $region3: #{cnn1_forward.1} parent=1 // loop_header
      %s21 = sphi 0, %s25
      %p22 = scmp.ge.s32.totalorder %s21, 4
      %s31 = sphi 0, %s33
      %s34 = sphi 0, %s31
      %s35 = sphi 0, %s34
      %s51 = sphi 0, %s35
      %s55 = sphi 0, %s55
      %s57 = sphi 0, %s55
      %s58 = sphi 0, %s57
      %s72 = sphi 0, %s58
      %s76 = sphi 0, %s76
      %s78 = sphi 0, %s76
      %s79 = sphi 0, %s78
      %s93 = sphi 0, %s79
      %s97 = sphi 0, %s97
      %s99 = sphi 0, %s97
      %s100 = sphi 0, %s99
      %s114 = sphi 0, %s100
      %s118 = sphi 0, %s118
      %s120 = sphi 0, %s118
      %s121 = sphi 0, %s120
      %s135 = sphi 0, %s121
      %s139 = sphi 0, %s139
      %s141 = sphi 0, %s139
      %s142 = sphi 0, %s141
      %s156 = sphi 0, %s142
      %s160 = sphi 0, %s160
      %s162 = sphi 0, %s160
      %s163 = sphi 0, %s162
      %s177 = sphi 0, %s163
      %s181 = sphi 0, %s181
      %s183 = sphi 0, %s181
      %s184 = sphi 0, %s183
      %s198 = sphi 0, %s184
      %s202 = sphi 0, %s202
      %s204 = sphi 0, %s202
      %s205 = sphi 0, %s204
      %s219 = sphi 0, %s205
      %s223 = sphi 0, %s223
      %s225 = sphi 0, %s223
      %s226 = sphi 0, %s225
      %s240 = sphi 0, %s226
      %s244 = sphi 0, %s244
      %s246 = sphi 0, %s244
      %s247 = sphi 0, %s246
      %s261 = sphi 0, %s247
      %s265 = sphi 0, %s265
      %s267 = sphi 0, %s265
      %s268 = sphi 0, %s267
      %s282 = sphi 0, %s268
      %s286 = sphi 0, %s286
      %s288 = sphi 0, %s286
      %s289 = sphi 0, %s288
      %s303 = sphi 0, %s289
      %s309 = sphi 0, %s311
      %s312 = sphi 0, %s309
      %s313 = sphi 0, %s312
      %s329 = sphi 0, %s313
    $region4: #{cnn1_forward.1} parent=1 // loop_header_branch
      %24 = sbr.rel (%p22) target = $region8
    $region5: #{cnn1_forward.1} parent=1 // loop_body
      %s26 = ssub.s32 %s21, 1
      %s27 = ssub.s32 %s21, 2
      %s28 = sadd.s32 %s21, 1
      %s29 = ssub.s32 %s21, %s28
      %p30 = scmp.eq.s32.totalorder %s29, 0
      %s32 = sadd.s32 %s31, 1
      %s33 = scalar_select %p30, %s31, %s32
      %p36 = pneg %p30
      %p37 = scmp.eq.s32.totalorder %s21, 1
      %p38 = por %p36, %p37
      %p39 = scmp.ne.s32.totalorder %s31, %s34
      %p40 = scmp.eq.s32.totalorder %s21, 0
      %p41 = por %p39, %p40
      %p42 = scmp.ne.s32.totalorder %s31, %s34
      %p43 = scmp.eq.s32.totalorder %s26, 1
      %p44 = por %p42, %p43
      %p45 = scmp.ne.s32.totalorder %s34, %s35
      %p46 = scmp.eq.s32.totalorder %s26, 0
      %p47 = por %p45, %p46
      %p48 = scmp.ne.s32.totalorder %s34, %s35
      %p49 = scmp.eq.s32.totalorder %s27, 1
      %p50 = por %p48, %p49
      %p52 = scmp.ne.s32.totalorder %s35, %s51
      %p53 = scmp.eq.s32.totalorder %s27, 0
      %p54 = por %p52, %p53
      %s56 = sadd.s32 %s55, 1
      %p59 = scmp.eq.s32.totalorder %s21, 1
      %p60 = scmp.ne.s32.totalorder %s55, %s57
      %p61 = scmp.eq.s32.totalorder %s21, 0
      %p62 = por %p60, %p61
      %p63 = scmp.ne.s32.totalorder %s55, %s57
      %p64 = scmp.eq.s32.totalorder %s26, 1
      %p65 = por %p63, %p64
      %p66 = scmp.ne.s32.totalorder %s57, %s58
      %p67 = scmp.eq.s32.totalorder %s26, 0
      %p68 = por %p66, %p67
      %p69 = scmp.ne.s32.totalorder %s57, %s58
      %p70 = scmp.eq.s32.totalorder %s27, 1
      %p71 = por %p69, %p70
      %p73 = scmp.ne.s32.totalorder %s58, %s72
      %p74 = scmp.eq.s32.totalorder %s27, 0
      %p75 = por %p73, %p74
      %s77 = sadd.s32 %s76, 1
      %p80 = scmp.eq.s32.totalorder %s21, 1
      %p81 = scmp.ne.s32.totalorder %s76, %s78
      %p82 = scmp.eq.s32.totalorder %s21, 0
      %p83 = por %p81, %p82
      %p84 = scmp.ne.s32.totalorder %s76, %s78
      %p85 = scmp.eq.s32.totalorder %s26, 1
      %p86 = por %p84, %p85
      %p87 = scmp.ne.s32.totalorder %s78, %s79
      %p88 = scmp.eq.s32.totalorder %s26, 0
      %p89 = por %p87, %p88
      %p90 = scmp.ne.s32.totalorder %s78, %s79
      %p91 = scmp.eq.s32.totalorder %s27, 1
      %p92 = por %p90, %p91
      %p94 = scmp.ne.s32.totalorder %s79, %s93
      %p95 = scmp.eq.s32.totalorder %s27, 0
      %p96 = por %p94, %p95
      %s98 = sadd.s32 %s97, 1
      %p101 = scmp.eq.s32.totalorder %s21, 1
      %p102 = scmp.ne.s32.totalorder %s97, %s99
      %p103 = scmp.eq.s32.totalorder %s21, 0
      %p104 = por %p102, %p103
      %p105 = scmp.ne.s32.totalorder %s97, %s99
      %p106 = scmp.eq.s32.totalorder %s26, 1
      %p107 = por %p105, %p106
      %p108 = scmp.ne.s32.totalorder %s99, %s100
      %p109 = scmp.eq.s32.totalorder %s26, 0
      %p110 = por %p108, %p109
      %p111 = scmp.ne.s32.totalorder %s99, %s100
      %p112 = scmp.eq.s32.totalorder %s27, 1
      %p113 = por %p111, %p112
      %p115 = scmp.ne.s32.totalorder %s100, %s114
      %p116 = scmp.eq.s32.totalorder %s27, 0
      %p117 = por %p115, %p116
      %s119 = sadd.s32 %s118, 1
      %p122 = scmp.eq.s32.totalorder %s21, 1
      %p123 = scmp.ne.s32.totalorder %s118, %s120
      %p124 = scmp.eq.s32.totalorder %s21, 0
      %p125 = por %p123, %p124
      %p126 = scmp.ne.s32.totalorder %s118, %s120
      %p127 = scmp.eq.s32.totalorder %s26, 1
      %p128 = por %p126, %p127
      %p129 = scmp.ne.s32.totalorder %s120, %s121
      %p130 = scmp.eq.s32.totalorder %s26, 0
      %p131 = por %p129, %p130
      %p132 = scmp.ne.s32.totalorder %s120, %s121
      %p133 = scmp.eq.s32.totalorder %s27, 1
      %p134 = por %p132, %p133
      %p136 = scmp.ne.s32.totalorder %s121, %s135
      %p137 = scmp.eq.s32.totalorder %s27, 0
      %p138 = por %p136, %p137
      %s140 = sadd.s32 %s139, 1
      %p143 = scmp.eq.s32.totalorder %s21, 1
      %p144 = scmp.ne.s32.totalorder %s139, %s141
      %p145 = scmp.eq.s32.totalorder %s21, 0
      %p146 = por %p144, %p145
      %p147 = scmp.ne.s32.totalorder %s139, %s141
      %p148 = scmp.eq.s32.totalorder %s26, 1
      %p149 = por %p147, %p148
      %p150 = scmp.ne.s32.totalorder %s141, %s142
      %p151 = scmp.eq.s32.totalorder %s26, 0
      %p152 = por %p150, %p151
      %p153 = scmp.ne.s32.totalorder %s141, %s142
      %p154 = scmp.eq.s32.totalorder %s27, 1
      %p155 = por %p153, %p154
      %p157 = scmp.ne.s32.totalorder %s142, %s156
      %p158 = scmp.eq.s32.totalorder %s27, 0
      %p159 = por %p157, %p158
      %s161 = sadd.s32 %s160, 1
      %p164 = scmp.eq.s32.totalorder %s21, 1
      %p165 = scmp.ne.s32.totalorder %s160, %s162
      %p166 = scmp.eq.s32.totalorder %s21, 0
      %p167 = por %p165, %p166
      %p168 = scmp.ne.s32.totalorder %s160, %s162
      %p169 = scmp.eq.s32.totalorder %s26, 1
      %p170 = por %p168, %p169
      %p171 = scmp.ne.s32.totalorder %s162, %s163
      %p172 = scmp.eq.s32.totalorder %s26, 0
      %p173 = por %p171, %p172
      %p174 = scmp.ne.s32.totalorder %s162, %s163
      %p175 = scmp.eq.s32.totalorder %s27, 1
      %p176 = por %p174, %p175
      %p178 = scmp.ne.s32.totalorder %s163, %s177
      %p179 = scmp.eq.s32.totalorder %s27, 0
      %p180 = por %p178, %p179
      %s182 = sadd.s32 %s181, 1
      %p185 = scmp.eq.s32.totalorder %s21, 1
      %p186 = scmp.ne.s32.totalorder %s181, %s183
      %p187 = scmp.eq.s32.totalorder %s21, 0
      %p188 = por %p186, %p187
      %p189 = scmp.ne.s32.totalorder %s181, %s183
      %p190 = scmp.eq.s32.totalorder %s26, 1
      %p191 = por %p189, %p190
      %p192 = scmp.ne.s32.totalorder %s183, %s184
      %p193 = scmp.eq.s32.totalorder %s26, 0
      %p194 = por %p192, %p193
      %p195 = scmp.ne.s32.totalorder %s183, %s184
      %p196 = scmp.eq.s32.totalorder %s27, 1
      %p197 = por %p195, %p196
      %p199 = scmp.ne.s32.totalorder %s184, %s198
      %p200 = scmp.eq.s32.totalorder %s27, 0
      %p201 = por %p199, %p200
      %s203 = sadd.s32 %s202, 1
      %p206 = scmp.eq.s32.totalorder %s21, 1
      %p207 = scmp.ne.s32.totalorder %s202, %s204
      %p208 = scmp.eq.s32.totalorder %s21, 0
      %p209 = por %p207, %p208
      %p210 = scmp.ne.s32.totalorder %s202, %s204
      %p211 = scmp.eq.s32.totalorder %s26, 1
      %p212 = por %p210, %p211
      %p213 = scmp.ne.s32.totalorder %s204, %s205
      %p214 = scmp.eq.s32.totalorder %s26, 0
      %p215 = por %p213, %p214
      %p216 = scmp.ne.s32.totalorder %s204, %s205
      %p217 = scmp.eq.s32.totalorder %s27, 1
      %p218 = por %p216, %p217
      %p220 = scmp.ne.s32.totalorder %s205, %s219
      %p221 = scmp.eq.s32.totalorder %s27, 0
      %p222 = por %p220, %p221
      %s224 = sadd.s32 %s223, 1
      %p227 = scmp.eq.s32.totalorder %s21, 1
      %p228 = scmp.ne.s32.totalorder %s223, %s225
      %p229 = scmp.eq.s32.totalorder %s21, 0
      %p230 = por %p228, %p229
      %p231 = scmp.ne.s32.totalorder %s223, %s225
      %p232 = scmp.eq.s32.totalorder %s26, 1
      %p233 = por %p231, %p232
      %p234 = scmp.ne.s32.totalorder %s225, %s226
      %p235 = scmp.eq.s32.totalorder %s26, 0
      %p236 = por %p234, %p235
      %p237 = scmp.ne.s32.totalorder %s225, %s226
      %p238 = scmp.eq.s32.totalorder %s27, 1
      %p239 = por %p237, %p238
      %p241 = scmp.ne.s32.totalorder %s226, %s240
      %p242 = scmp.eq.s32.totalorder %s27, 0
      %p243 = por %p241, %p242
      %s245 = sadd.s32 %s244, 1
      %p248 = scmp.eq.s32.totalorder %s21, 1
      %p249 = scmp.ne.s32.totalorder %s244, %s246
      %p250 = scmp.eq.s32.totalorder %s21, 0
      %p251 = por %p249, %p250
      %p252 = scmp.ne.s32.totalorder %s244, %s246
      %p253 = scmp.eq.s32.totalorder %s26, 1
      %p254 = por %p252, %p253
      %p255 = scmp.ne.s32.totalorder %s246, %s247
      %p256 = scmp.eq.s32.totalorder %s26, 0
      %p257 = por %p255, %p256
      %p258 = scmp.ne.s32.totalorder %s246, %s247
      %p259 = scmp.eq.s32.totalorder %s27, 1
      %p260 = por %p258, %p259
      %p262 = scmp.ne.s32.totalorder %s247, %s261
      %p263 = scmp.eq.s32.totalorder %s27, 0
      %p264 = por %p262, %p263
      %s266 = sadd.s32 %s265, 1
      %p269 = scmp.eq.s32.totalorder %s21, 1
      %p270 = scmp.ne.s32.totalorder %s265, %s267
      %p271 = scmp.eq.s32.totalorder %s21, 0
      %p272 = por %p270, %p271
      %p273 = scmp.ne.s32.totalorder %s265, %s267
      %p274 = scmp.eq.s32.totalorder %s26, 1
      %p275 = por %p273, %p274
      %p276 = scmp.ne.s32.totalorder %s267, %s268
      %p277 = scmp.eq.s32.totalorder %s26, 0
      %p278 = por %p276, %p277
      %p279 = scmp.ne.s32.totalorder %s267, %s268
      %p280 = scmp.eq.s32.totalorder %s27, 1
      %p281 = por %p279, %p280
      %p283 = scmp.ne.s32.totalorder %s268, %s282
      %p284 = scmp.eq.s32.totalorder %s27, 0
      %p285 = por %p283, %p284
      %s287 = sadd.s32 %s286, 1
      %p290 = scmp.eq.s32.totalorder %s21, 1
      %p291 = scmp.ne.s32.totalorder %s286, %s288
      %p292 = scmp.eq.s32.totalorder %s21, 0
      %p293 = por %p291, %p292
      %p294 = scmp.ne.s32.totalorder %s286, %s288
      %p295 = scmp.eq.s32.totalorder %s26, 1
      %p296 = por %p294, %p295
      %p297 = scmp.ne.s32.totalorder %s288, %s289
      %p298 = scmp.eq.s32.totalorder %s26, 0
      %p299 = por %p297, %p298
      %p300 = scmp.ne.s32.totalorder %s288, %s289
      %p301 = scmp.eq.s32.totalorder %s27, 1
      %p302 = por %p300, %p301
      %p304 = scmp.ne.s32.totalorder %s289, %s303
      %p305 = scmp.eq.s32.totalorder %s27, 0
      %p306 = por %p304, %p305
      %s307 = ssub.s32 %s21, %s28
      %p308 = scmp.eq.s32.totalorder %s307, 0
      %s310 = sadd.s32 %s309, 1
      %s311 = scalar_select %p308, %s309, %s310
      %p314 = pneg %p308
      %p315 = scmp.eq.s32.totalorder %s21, 1
      %p316 = por %p314, %p315
      %p317 = scmp.ne.s32.totalorder %s309, %s312
      %p318 = scmp.eq.s32.totalorder %s21, 0
      %p319 = por %p317, %p318
      %p320 = scmp.ne.s32.totalorder %s309, %s312
      %p321 = scmp.eq.s32.totalorder %s26, 1
      %p322 = por %p320, %p321
      %p323 = scmp.ne.s32.totalorder %s312, %s313
      %p324 = scmp.eq.s32.totalorder %s26, 0
      %p325 = por %p323, %p324
      %p326 = scmp.ne.s32.totalorder %s312, %s313
      %p327 = scmp.eq.s32.totalorder %s27, 1
      %p328 = por %p326, %p327
      %p330 = scmp.ne.s32.totalorder %s313, %s329
      %p331 = scmp.eq.s32.totalorder %s27, 0
      %p332 = por %p330, %p331
      %p333 = scmp.le.s32.totalorder 1, %s21
      %p334 = scmp.lt.s32.totalorder %s21, 3
      %p335 = pnand %p333, %p334
      %p336 = pneg %p335
      // Predicated region
      $region9: #{cnn1_forward.1} parent=5 // pred_check
        _
      $region10: #{cnn1_forward.1} parent=5 // pred_check_branch
        %338 = sbr.rel (%p335) target = $region12
      $region11: #{cnn1_forward.1} parent=5 // pred_region
        %s339 = ssub.s32 %s21, 1
        // Predicated region
        $region13: #{cnn1_forward.1} parent=11 // pred_check
          %p340 = pneg %p68
        $region14: #{cnn1_forward.1} parent=11 // pred_check_branch
          %342 = sbr.rel (%p340) target = $region16
        $region15: #{cnn1_forward.1} parent=11 // pred_region
          _
        $region16: #{cnn1_forward.1} parent=11 // pred_fallthru
          _
        // Predicated region
        $region17: #{cnn1_forward.1} parent=11 // pred_check
          %p343 = pneg %p89
        $region18: #{cnn1_forward.1} parent=11 // pred_check_branch
          %345 = sbr.rel (%p343) target = $region20
        $region19: #{cnn1_forward.1} parent=11 // pred_region
          _
        $region20: #{cnn1_forward.1} parent=11 // pred_fallthru
          _
        // Predicated region
        $region21: #{cnn1_forward.1} parent=11 // pred_check
          %p346 = pneg %p110
        $region22: #{cnn1_forward.1} parent=11 // pred_check_branch
          %348 = sbr.rel (%p346) target = $region24
        $region23: #{cnn1_forward.1} parent=11 // pred_region
          _
        $region24: #{cnn1_forward.1} parent=11 // pred_fallthru
          _
        // Predicated region
        $region25: #{cnn1_forward.1} parent=11 // pred_check
          %p349 = pneg %p131
        $region26: #{cnn1_forward.1} parent=11 // pred_check_branch
          %351 = sbr.rel (%p349) target = $region28
        $region27: #{cnn1_forward.1} parent=11 // pred_region
          _
        $region28: #{cnn1_forward.1} parent=11 // pred_fallthru
          _
        // Predicated region
        $region29: #{cnn1_forward.1} parent=11 // pred_check
          %p352 = pneg %p152
        $region30: #{cnn1_forward.1} parent=11 // pred_check_branch
          %354 = sbr.rel (%p352) target = $region32
        $region31: #{cnn1_forward.1} parent=11 // pred_region
          _
        $region32: #{cnn1_forward.1} parent=11 // pred_fallthru
          _
        // Predicated region
        $region33: #{cnn1_forward.1} parent=11 // pred_check
          %p355 = pneg %p173
        $region34: #{cnn1_forward.1} parent=11 // pred_check_branch
          %357 = sbr.rel (%p355) target = $region36
        $region35: #{cnn1_forward.1} parent=11 // pred_region
          _
        $region36: #{cnn1_forward.1} parent=11 // pred_fallthru
          _
        // Predicated region
        $region37: #{cnn1_forward.1} parent=11 // pred_check
          %p358 = pneg %p194
        $region38: #{cnn1_forward.1} parent=11 // pred_check_branch
          %360 = sbr.rel (%p358) target = $region40
        $region39: #{cnn1_forward.1} parent=11 // pred_region
          _
        $region40: #{cnn1_forward.1} parent=11 // pred_fallthru
          _
        // Predicated region
        $region41: #{cnn1_forward.1} parent=11 // pred_check
          %p361 = pneg %p215
        $region42: #{cnn1_forward.1} parent=11 // pred_check_branch
          %363 = sbr.rel (%p361) target = $region44
        $region43: #{cnn1_forward.1} parent=11 // pred_region
          _
        $region44: #{cnn1_forward.1} parent=11 // pred_fallthru
          _
        // Predicated region
        $region45: #{cnn1_forward.1} parent=11 // pred_check
          %p364 = pneg %p236
        $region46: #{cnn1_forward.1} parent=11 // pred_check_branch
          %366 = sbr.rel (%p364) target = $region48
        $region47: #{cnn1_forward.1} parent=11 // pred_region
          _
        $region48: #{cnn1_forward.1} parent=11 // pred_fallthru
          _
        // Predicated region
        $region49: #{cnn1_forward.1} parent=11 // pred_check
          %p367 = pneg %p257
        $region50: #{cnn1_forward.1} parent=11 // pred_check_branch
          %369 = sbr.rel (%p367) target = $region52
        $region51: #{cnn1_forward.1} parent=11 // pred_region
          _
        $region52: #{cnn1_forward.1} parent=11 // pred_fallthru
          _
        // Predicated region
        $region53: #{cnn1_forward.1} parent=11 // pred_check
          %p370 = pneg %p278
        $region54: #{cnn1_forward.1} parent=11 // pred_check_branch
          %372 = sbr.rel (%p370) target = $region56
        $region55: #{cnn1_forward.1} parent=11 // pred_region
          _
        $region56: #{cnn1_forward.1} parent=11 // pred_fallthru
          _
        // Predicated region
        $region57: #{cnn1_forward.1} parent=11 // pred_check
          %p373 = pneg %p299
        $region58: #{cnn1_forward.1} parent=11 // pred_check_branch
          %375 = sbr.rel (%p373) target = $region60
        $region59: #{cnn1_forward.1} parent=11 // pred_region
          _
        $region60: #{cnn1_forward.1} parent=11 // pred_fallthru
          _
      $region12: #{cnn1_forward.1} parent=5 // pred_fallthru
        _
      %p376 = scmp.lt.s32.totalorder %s21, 2
      // Predicated region
      $region61: #{cnn1_forward.1} parent=5 // pred_check
        %p377 = pneg %p376
      $region62: #{cnn1_forward.1} parent=5 // pred_check_branch
        %379 = sbr.rel (%p377) target = $region64
      $region63: #{cnn1_forward.1} parent=5 // pred_region
        // Predicated region
        $region65: #{cnn1_forward.1} parent=63 // pred_check
          %p380 = pneg %p41
        $region66: #{cnn1_forward.1} parent=63 // pred_check_branch
          %382 = sbr.rel (%p380) target = $region68
        $region67: #{cnn1_forward.1} parent=63 // pred_region
          %s383 = sand.u32 %s31, 1
          %s384 = sand.u32 %s31, 1
          %s385 = smul.addr %s384, 16
          %s386 = scalar_lea.vmem [#allocation3], %s385
          %s387 = smul.u32 2, %s21
          %s388 = smul.addr %s387, 4
          %s389 = scalar_lea.vmem %s0, %s388
          // Predicated region
          $region69: #{cnn1_forward.1} parent=67 // pred_check
            _
          $region70: #{cnn1_forward.1} parent=67 // pred_check_branch
            %391 = sbr.rel (0) target = $region72
          $region71: #{cnn1_forward.1} parent=67 // pred_region
            // Predicated region
            $region73: #{cnn1_forward.1} parent=71 // pred_check
              _
            $region74: #{cnn1_forward.1} parent=71 // pred_check_branch
              %393 = sbr.rel (0) target = $region76
            $region75: #{cnn1_forward.1} parent=71 // pred_region
              // Predicated region
              $region88: #{cnn1_forward.1} parent=75 // pred_check
                _
              $region89: #{cnn1_forward.1} parent=75 // pred_check_branch
                %411 = sbr.rel (0) target = $region91
              $region90: #{cnn1_forward.1} parent=75 // pred_region
                loop: start=0, step=1, limit=1
                $region92: #{cnn1_forward.1} parent=90 // loop_pre_header
                  _
                $region93: #{cnn1_forward.1} parent=90 // loop_header
                  %s413 = sphi 0, %s417
                  %p414 = scmp.ge.s32.totalorder %s413, 1
                  %s418 = sphi %s389, %s389
                  %s419 = sphi %s386, %s386
                $region94: #{cnn1_forward.1} parent=90 // loop_header_branch
                  %416 = sbr.rel (%p414) target = $region98
                $region95: #{cnn1_forward.1} parent=90 // loop_body
                  %v420 = vld [vmem:[%s418] sm:$0xff]
                  %421 = vst [vmem:[%s419] sm:$0xff] %v420
                  %v422 = vld [vmem:[%s418 + $0x10] sm:$0xff]
                  %423 = vst [vmem:[%s419 + $0x8] sm:$0xff] %v422
                $region96: #{cnn1_forward.1} parent=90 // loop_footer
                  %s417 = sadd.s32 1, %s413
                $region97: #{cnn1_forward.1} parent=90 // loop_footer_branch
                  %412 = sbr.rel target = $region93
                $region98: #{cnn1_forward.1} parent=90 // loop_exit
                  _
              $region91: #{cnn1_forward.1} parent=75 // pred_fallthru
                _
              // Predicated region
              $region99: #{cnn1_forward.1} parent=75 // pred_check
                _
              $region100: #{cnn1_forward.1} parent=75 // pred_check_branch
                %425 = sbr.rel target = $region102
              $region101: #{cnn1_forward.1} parent=75 // pred_region
                _
              $region102: #{cnn1_forward.1} parent=75 // pred_fallthru
                _
            $region76: #{cnn1_forward.1} parent=71 // pred_fallthru
              _
            // Predicated region
            $region77: #{cnn1_forward.1} parent=71 // pred_check
              _
            $region78: #{cnn1_forward.1} parent=71 // pred_check_branch
              %395 = sbr.rel target = $region80
            $region79: #{cnn1_forward.1} parent=71 // pred_region
              %s397 = ssub.s32 256, 1
              loop: start=0, step=1, limit=1
              $region81: #{cnn1_forward.1} parent=79 // loop_pre_header
                _
              $region82: #{cnn1_forward.1} parent=79 // loop_header
                %s399 = sphi 0, %s403
                %p400 = scmp.ge.s32.totalorder %s399, 1
                %s404 = sphi %s389, %s389
                %s405 = sphi %s386, %s386
              $region83: #{cnn1_forward.1} parent=79 // loop_header_branch
                %402 = sbr.rel (%p400) target = $region87
              $region84: #{cnn1_forward.1} parent=79 // loop_body
                %v406 = vld [vmem:[%s404] sm:%s397]
                %407 = vst [vmem:[%s405] sm:%s397] %v406
                %v408 = vld [vmem:[%s404 + $0x10] sm:%s397]
                %409 = vst [vmem:[%s405 + $0x8] sm:%s397] %v408
              $region85: #{cnn1_forward.1} parent=79 // loop_footer
                %s403 = sadd.s32 1, %s399
              $region86: #{cnn1_forward.1} parent=79 // loop_footer_branch
                %398 = sbr.rel target = $region82
              $region87: #{cnn1_forward.1} parent=79 // loop_exit
                _
            $region80: #{cnn1_forward.1} parent=71 // pred_fallthru
              _
          $region72: #{cnn1_forward.1} parent=67 // pred_fallthru
            _
          %426 = vnop
        $region68: #{cnn1_forward.1} parent=63 // pred_fallthru
          _
      $region64: #{cnn1_forward.1} parent=5 // pred_fallthru
        _
      %p427 = scmp.le.s32.totalorder 1, %s21
      %p428 = scmp.lt.s32.totalorder %s21, 3
      %p429 = pnand %p427, %p428
      %p430 = pneg %p429
      // Predicated region
      $region103: #{cnn1_forward.1} parent=5 // pred_check
        _
      $region104: #{cnn1_forward.1} parent=5 // pred_check_branch
        %432 = sbr.rel (%p429) target = $region106
      $region105: #{cnn1_forward.1} parent=5 // pred_region
        %s433 = ssub.s32 %s21, 1
        %s434 = sand.u32 %s34, 1
        %s435 = sand.u32 %s34, 1
        %s436 = smul.addr %s435, 16
        %s437 = scalar_lea.vmem [#allocation3], %s436
        // Predicated region
        $region107: #{cnn1_forward.1} parent=105 // pred_check
          %p438 = pneg %p47
        $region108: #{cnn1_forward.1} parent=105 // pred_check_branch
          %440 = sbr.rel (%p438) target = $region110
        $region109: #{cnn1_forward.1} parent=105 // pred_region
          _
        $region110: #{cnn1_forward.1} parent=105 // pred_fallthru
          _
        %s441 = sand.u32 %s34, 1
        %s442 = sand.u32 %s34, 1
        %s443 = smul.addr %s442, 16
        %s444 = scalar_lea.vmem [#allocation3], %s443
        %p445 = pneg %p47
        %p446 = pneg %p44
        %p447 = pneg %p68
        %p448 = pneg %p65
        %p449 = pneg %p89
        %p450 = pneg %p86
        %p451 = pneg %p110
        %p452 = pneg %p107
        %p453 = pneg %p131
        %p454 = pneg %p128
        %p455 = pneg %p152
        %p456 = pneg %p149
        %p457 = pneg %p173
        %p458 = pneg %p170
        %p459 = pneg %p194
        %p460 = pneg %p191
        %p461 = pneg %p215
        %p462 = pneg %p212
        %p463 = pneg %p236
        %p464 = pneg %p233
        %p465 = pneg %p257
        %p466 = pneg %p254
        %p467 = pneg %p278
        %p468 = pneg %p275
        %p469 = pneg %p299
        %p470 = pneg %p296
        %p471 = pneg %p325
        %p472 = pneg %p322
        %s473 = smul.u32 2, %s26
        %p474 = scmp.lt.s32.totalorder %s473, 3
        %s475 = scalar_select %p474, %s473, 3
        %s476 = scalar_lea.vmem %s13, %s475
        %s477 = smul.u32 2, %s26
        %s478 = smul.u32 2, %s26
        %p479 = scmp.lt.s32.totalorder %s478, 3
        %s480 = scalar_select %p479, %s478, 3
        %s481 = scalar_lea.vmem %s13, %s480
        %s482 = smul.u32 2, %s26
        %v484 = vld [vmem:[%s437] sm:$0xff]
        %v485 = vld [vmem:[%s437 + $0x8] sm:$0xff]
        %v486 = vld [vmem:[%s1] sm:$0xf]
        %v487 = vld [vmem:[%s1 + $0x4] sm:$0xf]
        %v488 = vld [vmem:[%s1 + $0x8] sm:$0xf]
        %v489 = vld [vmem:[%s1 + $0xc] sm:$0xf]
        %v490 = vld [vmem:[%s2] sm:$0xff]
        %v491 = vld [vmem:[%s2 + $0x8] sm:$0xff]
        %v492 = vld [vmem:[%s2 + $0x10] sm:$0xff]
        %v493 = vld [vmem:[%s2 + $0x18] sm:$0xff]
        %495 = vset.pattern.permute.xlu0 0
        %496 = vperm.xlu0 %495, %v490
        %v497 = vpop.permute.xlu0 %496
        %500 = vset.pattern.permute.xlu0 0
        %501 = vperm.xlu0 %500, %v491
        %v502 = vpop.permute.xlu0 %501
        %505 = vset.pattern.permute.xlu0 0
        %506 = vperm.xlu0 %505, %v492
        %v507 = vpop.permute.xlu0 %506
        %510 = vset.pattern.permute.xlu0 0
        %511 = vperm.xlu0 %510, %v493
        %v512 = vpop.permute.xlu0 %511
        %v518 = vunpack.c.l.b16 %v486
        %v519 = vunpack.c.l.b16 %v487
        %v520 = vunpack.c.l.b16 %v488
        %v521 = vunpack.c.l.b16 %v489
        %v522 = vpack.c.b16 %v519, %v518
        %v523 = vpack.c.b16 %v521, %v520
        %v526 = vunpack.c.l.b16 %v484
        %v527 = vunpack.c.h.b16 %v484
        %v528 = vunpack.c.l.b16 %v485
        %v529 = vunpack.c.h.b16 %v485
        %v530 = vpack.c.b16 %v528, %v526
        %v531 = vpack.c.b16 %v529, %v527
        %vm534 = vcmask 130048
        %v536 = vsel %vm534, %v522, 0
        %v539 = vsel %vm534, %v523, 0
        %541 = vmatpush.bf16.msra.mxu0 0
        %542 = vmatpush.bf16.msra.mxu0 0
        %543 = vmatpush.bf16.msra.mxu0 0
        %544 = vmatpush.bf16.msra.mxu0 0
        %545 = vmatpush.bf16.msra.mxu0 0
        %546 = vmatpush.bf16.msra.mxu0 0
        %547 = vmatpush.bf16.msra.mxu0 0
        %548 = vmatpush.bf16.msra.mxu0 %v530
        %549 = vmatmul.bf16.gmra.mxu0 %v536
        %v550 = vpop.f32.mrf.mxu0
        %v551 = vadd.f32 %v497, %v550
        %v552 = vpop.f32.mrf.mxu0
        %v553 = vadd.f32 %v502, %v552
        %554 = vmatmul.bf16.gmra.mxu0 %v539
        %v555 = vpop.f32.mrf.mxu0
        %v556 = vadd.f32 %v507, %v555
        %v557 = vpop.f32.mrf.mxu0
        %v558 = vadd.f32 %v512, %v557
        %559 = vdwg.mxu0
        %560 = vmatpush.bf16.msra.mxu0 0
        %561 = vmatpush.bf16.msra.mxu0 0
        %562 = vmatpush.bf16.msra.mxu0 0
        %563 = vmatpush.bf16.msra.mxu0 0
        %564 = vmatpush.bf16.msra.mxu0 0
        %565 = vmatpush.bf16.msra.mxu0 0
        %566 = vmatpush.bf16.msra.mxu0 0
        %567 = vmatpush.bf16.msra.mxu0 %v531
        %568 = vmatmul.bf16.gmra.mxu0 %v536
        %v569 = vpop.f32.mrf.mxu0
        %v570 = vadd.f32 %v497, %v569
        %v571 = vpop.f32.mrf.mxu0
        %v572 = vadd.f32 %v502, %v571
        %573 = vmatmul.bf16.gmra.mxu0 %v539
        %v574 = vpop.f32.mrf.mxu0
        %v575 = vadd.f32 %v507, %v574
        %v576 = vpop.f32.mrf.mxu0
        %v577 = vadd.f32 %v512, %v576
        %578 = vdwg.mxu0
        %v579 = vmax.f32 %v551, 0.0
        %v580 = vmax.f32 %v570, 0.0
        %v581 = vmax.f32 %v553, 0.0
        %v582 = vmax.f32 %v572, 0.0
        %v583 = vmax.f32 %v556, 0.0
        %v584 = vmax.f32 %v575, 0.0
        %v585 = vmax.f32 %v558, 0.0
        %v586 = vmax.f32 %v577, 0.0
        %v587 = vpack.c.bf16 %v581, %v579
        %v588 = vpack.c.bf16 %v582, %v580
        %v589 = vpack.c.bf16 %v585, %v583
        %v590 = vpack.c.bf16 %v586, %v584
        %v591 = vld [vmem:[%s3] sm:$0xf]
        %v592 = vld [vmem:[%s3 + $0x4] sm:$0xf]
        %v593 = vld [vmem:[%s3 + $0x8] sm:$0xf]
        %v594 = vld [vmem:[%s3 + $0xc] sm:$0xf]
        %v595 = vld [vmem:[%s3 + $0x10] sm:$0xf]
        %v596 = vld [vmem:[%s3 + $0x14] sm:$0xf]
        %v597 = vld [vmem:[%s3 + $0x18] sm:$0xf]
        %v598 = vld [vmem:[%s3 + $0x1c] sm:$0xf]
        %v599 = vld [vmem:[%s4] sm:$0xff]
        %v600 = vld [vmem:[%s4 + $0x8] sm:$0xff]
        %v601 = vld [vmem:[%s4 + $0x10] sm:$0xff]
        %v602 = vld [vmem:[%s4 + $0x18] sm:$0xff]
        %v603 = vld [vmem:[%s4 + $0x20] sm:$0xff]
        %v604 = vld [vmem:[%s4 + $0x28] sm:$0xff]
        %v605 = vld [vmem:[%s4 + $0x30] sm:$0xff]
        %v606 = vld [vmem:[%s4 + $0x38] sm:$0xff]
        %608 = vset.pattern.permute.xlu0 0
        %609 = vperm.xlu0 %608, %v599
        %v610 = vpop.permute.xlu0 %609
        %613 = vset.pattern.permute.xlu0 0
        %614 = vperm.xlu0 %613, %v600
        %v615 = vpop.permute.xlu0 %614
        %618 = vset.pattern.permute.xlu0 0
        %619 = vperm.xlu0 %618, %v601
        %v620 = vpop.permute.xlu0 %619
        %623 = vset.pattern.permute.xlu0 0
        %624 = vperm.xlu0 %623, %v602
        %v625 = vpop.permute.xlu0 %624
        %628 = vset.pattern.permute.xlu0 0
        %629 = vperm.xlu0 %628, %v603
        %v630 = vpop.permute.xlu0 %629
        %633 = vset.pattern.permute.xlu0 0
        %634 = vperm.xlu0 %633, %v604
        %v635 = vpop.permute.xlu0 %634
        %638 = vset.pattern.permute.xlu0 0
        %639 = vperm.xlu0 %638, %v605
        %v640 = vpop.permute.xlu0 %639
        %643 = vset.pattern.permute.xlu0 0
        %644 = vperm.xlu0 %643, %v606
        %v645 = vpop.permute.xlu0 %644
        %v655 = vunpack.c.l.b16 %v591
        %v656 = vunpack.c.l.b16 %v592
        %v657 = vunpack.c.l.b16 %v593
        %v658 = vunpack.c.l.b16 %v594
        %v659 = vunpack.c.l.b16 %v595
        %v660 = vunpack.c.l.b16 %v596
        %v661 = vunpack.c.l.b16 %v597
        %v662 = vunpack.c.l.b16 %v598
        %v663 = vpack.c.b16 %v656, %v655
        %v664 = vpack.c.b16 %v658, %v657
        %v665 = vpack.c.b16 %v660, %v659
        %v666 = vpack.c.b16 %v662, %v661
        %vm667 = vcmask 261120
        %v669 = vsel %vm667, %v663, 0
        %v672 = vsel %vm667, %v664, 0
        %v675 = vsel %vm667, %v665, 0
        %v678 = vsel %vm667, %v666, 0
        %680 = vmatpush.bf16.msra.mxu0 0
        %681 = vmatpush.bf16.msra.mxu0 0
        %682 = vmatpush.bf16.msra.mxu0 0
        %683 = vmatpush.bf16.msra.mxu0 0
        %684 = vmatpush.bf16.msra.mxu0 0
        %685 = vmatpush.bf16.msra.mxu0 0
        %686 = vmatpush.bf16.msra.mxu0 %v589
        %687 = vmatpush.bf16.msra.mxu0 %v587
        %688 = vmatmul.bf16.gmra.mxu0 %v669
        %v689 = vpop.f32.mrf.mxu0
        %v690 = vadd.f32 %v610, %v689
        %v691 = vpop.f32.mrf.mxu0
        %v692 = vadd.f32 %v615, %v691
        %693 = vmatmul.bf16.gmra.mxu0 %v672
        %v694 = vpop.f32.mrf.mxu0
        %v695 = vadd.f32 %v620, %v694
        %v696 = vpop.f32.mrf.mxu0
        %v697 = vadd.f32 %v625, %v696
        %698 = vmatmul.bf16.gmra.mxu0 %v675
        %v699 = vpop.f32.mrf.mxu0
        %v700 = vadd.f32 %v630, %v699
        %v701 = vpop.f32.mrf.mxu0
        %v702 = vadd.f32 %v635, %v701
        %703 = vmatmul.bf16.gmra.mxu0 %v678
        %v704 = vpop.f32.mrf.mxu0
        %v705 = vadd.f32 %v640, %v704
        %v706 = vpop.f32.mrf.mxu0
        %v707 = vadd.f32 %v645, %v706
        %708 = vdwg.mxu0
        %709 = vmatpush.bf16.msra.mxu0 0
        %710 = vmatpush.bf16.msra.mxu0 0
        %711 = vmatpush.bf16.msra.mxu0 0
        %712 = vmatpush.bf16.msra.mxu0 0
        %713 = vmatpush.bf16.msra.mxu0 0
        %714 = vmatpush.bf16.msra.mxu0 0
        %715 = vmatpush.bf16.msra.mxu0 %v590
        %716 = vmatpush.bf16.msra.mxu0 %v588
        %717 = vmatmul.bf16.gmra.mxu0 %v669
        %v718 = vpop.f32.mrf.mxu0
        %v719 = vadd.f32 %v610, %v718
        %v720 = vpop.f32.mrf.mxu0
        %v721 = vadd.f32 %v615, %v720
        %722 = vmatmul.bf16.gmra.mxu0 %v672
        %v723 = vpop.f32.mrf.mxu0
        %v724 = vadd.f32 %v620, %v723
        %v725 = vpop.f32.mrf.mxu0
        %v726 = vadd.f32 %v625, %v725
        %727 = vmatmul.bf16.gmra.mxu0 %v675
        %v728 = vpop.f32.mrf.mxu0
        %v729 = vadd.f32 %v630, %v728
        %v730 = vpop.f32.mrf.mxu0
        %v731 = vadd.f32 %v635, %v730
        %732 = vmatmul.bf16.gmra.mxu0 %v678
        %v733 = vpop.f32.mrf.mxu0
        %v734 = vadd.f32 %v640, %v733
        %v735 = vpop.f32.mrf.mxu0
        %v736 = vadd.f32 %v645, %v735
        %737 = vdwg.mxu0
        %v738 = vmax.f32 %v690, 0.0
        %v739 = vmax.f32 %v719, 0.0
        %v740 = vmax.f32 %v692, 0.0
        %v741 = vmax.f32 %v721, 0.0
        %v742 = vmax.f32 %v695, 0.0
        %v743 = vmax.f32 %v724, 0.0
        %v744 = vmax.f32 %v697, 0.0
        %v745 = vmax.f32 %v726, 0.0
        %v746 = vmax.f32 %v700, 0.0
        %v747 = vmax.f32 %v729, 0.0
        %v748 = vmax.f32 %v702, 0.0
        %v749 = vmax.f32 %v731, 0.0
        %v750 = vmax.f32 %v705, 0.0
        %v751 = vmax.f32 %v734, 0.0
        %v752 = vmax.f32 %v707, 0.0
        %v753 = vmax.f32 %v736, 0.0
        %v754 = vpack.c.bf16 %v740, %v738
        %v755 = vpack.c.bf16 %v741, %v739
        %v756 = vpack.c.bf16 %v744, %v742
        %v757 = vpack.c.bf16 %v745, %v743
        %v758 = vpack.c.bf16 %v748, %v746
        %v759 = vpack.c.bf16 %v749, %v747
        %v760 = vpack.c.bf16 %v752, %v750
        %v761 = vpack.c.bf16 %v753, %v751
        %v762 = vld [vmem:[%s5] sm:$0xf]
        %v763 = vld [vmem:[%s5 + $0x4] sm:$0xf]
        %v764 = vld [vmem:[%s5 + $0x8] sm:$0xf]
        %v765 = vld [vmem:[%s5 + $0xc] sm:$0xf]
        %v766 = vld [vmem:[%s5 + $0x10] sm:$0xf]
        %v767 = vld [vmem:[%s5 + $0x14] sm:$0xf]
        %v768 = vld [vmem:[%s5 + $0x18] sm:$0xf]
        %v769 = vld [vmem:[%s5 + $0x1c] sm:$0xf]
        %v770 = vld [vmem:[%s6] sm:$0xff]
        %v771 = vld [vmem:[%s6 + $0x8] sm:$0xff]
        %v772 = vld [vmem:[%s6 + $0x10] sm:$0xff]
        %v773 = vld [vmem:[%s6 + $0x18] sm:$0xff]
        %v774 = vld [vmem:[%s6 + $0x20] sm:$0xff]
        %v775 = vld [vmem:[%s6 + $0x28] sm:$0xff]
        %v776 = vld [vmem:[%s6 + $0x30] sm:$0xff]
        %v777 = vld [vmem:[%s6 + $0x38] sm:$0xff]
        %779 = vset.pattern.permute.xlu0 0
        %780 = vperm.xlu0 %779, %v770
        %v781 = vpop.permute.xlu0 %780
        %784 = vset.pattern.permute.xlu0 0
        %785 = vperm.xlu0 %784, %v771
        %v786 = vpop.permute.xlu0 %785
        %789 = vset.pattern.permute.xlu0 0
        %790 = vperm.xlu0 %789, %v772
        %v791 = vpop.permute.xlu0 %790
        %794 = vset.pattern.permute.xlu0 0
        %795 = vperm.xlu0 %794, %v773
        %v796 = vpop.permute.xlu0 %795
        %799 = vset.pattern.permute.xlu0 0
        %800 = vperm.xlu0 %799, %v774
        %v801 = vpop.permute.xlu0 %800
        %804 = vset.pattern.permute.xlu0 0
        %805 = vperm.xlu0 %804, %v775
        %v806 = vpop.permute.xlu0 %805
        %809 = vset.pattern.permute.xlu0 0
        %810 = vperm.xlu0 %809, %v776
        %v811 = vpop.permute.xlu0 %810
        %814 = vset.pattern.permute.xlu0 0
        %815 = vperm.xlu0 %814, %v777
        %v816 = vpop.permute.xlu0 %815
        %v826 = vunpack.c.l.b16 %v762
        %v827 = vunpack.c.l.b16 %v763
        %v828 = vunpack.c.l.b16 %v764
        %v829 = vunpack.c.l.b16 %v765
        %v830 = vunpack.c.l.b16 %v766
        %v831 = vunpack.c.l.b16 %v767
        %v832 = vunpack.c.l.b16 %v768
        %v833 = vunpack.c.l.b16 %v769
        %v834 = vpack.c.b16 %v827, %v826
        %v835 = vpack.c.b16 %v829, %v828
        %v836 = vpack.c.b16 %v831, %v830
        %v837 = vpack.c.b16 %v833, %v832
        %vm838 = vcmask 523264
        %v840 = vsel %vm838, %v834, 0
        %v843 = vsel %vm838, %v835, 0
        %v846 = vsel %vm838, %v836, 0
        %v849 = vsel %vm838, %v837, 0
        %851 = vmatpush.bf16.msra.mxu0 0
        %852 = vmatpush.bf16.msra.mxu0 0
        %853 = vmatpush.bf16.msra.mxu0 0
        %854 = vmatpush.bf16.msra.mxu0 0
        %855 = vmatpush.bf16.msra.mxu0 %v760
        %856 = vmatpush.bf16.msra.mxu0 %v758
        %857 = vmatpush.bf16.msra.mxu0 %v756
        %858 = vmatpush.bf16.msra.mxu0 %v754
        %859 = vmatmul.bf16.gmra.mxu0 %v840
        %v860 = vpop.f32.mrf.mxu0
        %v861 = vadd.f32 %v781, %v860
        %v862 = vpop.f32.mrf.mxu0
        %v863 = vadd.f32 %v786, %v862
        %864 = vmatmul.bf16.gmra.mxu0 %v843
        %v865 = vpop.f32.mrf.mxu0
        %v866 = vadd.f32 %v791, %v865
        %v867 = vpop.f32.mrf.mxu0
        %v868 = vadd.f32 %v796, %v867
        %869 = vmatmul.bf16.gmra.mxu0 %v846
        %v870 = vpop.f32.mrf.mxu0
        %v871 = vadd.f32 %v801, %v870
        %v872 = vpop.f32.mrf.mxu0
        %v873 = vadd.f32 %v806, %v872
        %874 = vmatmul.bf16.gmra.mxu0 %v849
        %v875 = vpop.f32.mrf.mxu0
        %v876 = vadd.f32 %v811, %v875
        %v877 = vpop.f32.mrf.mxu0
        %v878 = vadd.f32 %v816, %v877
        %879 = vdwg.mxu0
        %880 = vmatpush.bf16.msra.mxu0 0
        %881 = vmatpush.bf16.msra.mxu0 0
        %882 = vmatpush.bf16.msra.mxu0 0
        %883 = vmatpush.bf16.msra.mxu0 0
        %884 = vmatpush.bf16.msra.mxu0 %v761
        %885 = vmatpush.bf16.msra.mxu0 %v759
        %886 = vmatpush.bf16.msra.mxu0 %v757
        %887 = vmatpush.bf16.msra.mxu0 %v755
        %888 = vmatmul.bf16.gmra.mxu0 %v840
        %v889 = vpop.f32.mrf.mxu0
        %v890 = vadd.f32 %v781, %v889
        %v891 = vpop.f32.mrf.mxu0
        %v892 = vadd.f32 %v786, %v891
        %893 = vmatmul.bf16.gmra.mxu0 %v843
        %v894 = vpop.f32.mrf.mxu0
        %v895 = vadd.f32 %v791, %v894
        %v896 = vpop.f32.mrf.mxu0
        %v897 = vadd.f32 %v796, %v896
        %898 = vmatmul.bf16.gmra.mxu0 %v846
        %v899 = vpop.f32.mrf.mxu0
        %v900 = vadd.f32 %v801, %v899
        %v901 = vpop.f32.mrf.mxu0
        %v902 = vadd.f32 %v806, %v901
        %903 = vmatmul.bf16.gmra.mxu0 %v849
        %v904 = vpop.f32.mrf.mxu0
        %v905 = vadd.f32 %v811, %v904
        %v906 = vpop.f32.mrf.mxu0
        %v907 = vadd.f32 %v816, %v906
        %908 = vdwg.mxu0
        %v909 = vmax.f32 %v861, 0.0
        %v910 = vmax.f32 %v890, 0.0
        %v911 = vmax.f32 %v863, 0.0
        %v912 = vmax.f32 %v892, 0.0
        %v913 = vmax.f32 %v866, 0.0
        %v914 = vmax.f32 %v895, 0.0
        %v915 = vmax.f32 %v868, 0.0
        %v916 = vmax.f32 %v897, 0.0
        %v917 = vmax.f32 %v871, 0.0
        %v918 = vmax.f32 %v900, 0.0
        %v919 = vmax.f32 %v873, 0.0
        %v920 = vmax.f32 %v902, 0.0
        %v921 = vmax.f32 %v876, 0.0
        %v922 = vmax.f32 %v905, 0.0
        %v923 = vmax.f32 %v878, 0.0
        %v924 = vmax.f32 %v907, 0.0
        %v925 = vpack.c.bf16 %v911, %v909
        %v926 = vpack.c.bf16 %v912, %v910
        %v927 = vpack.c.bf16 %v915, %v913
        %v928 = vpack.c.bf16 %v916, %v914
        %v929 = vpack.c.bf16 %v919, %v917
        %v930 = vpack.c.bf16 %v920, %v918
        %v931 = vpack.c.bf16 %v923, %v921
        %v932 = vpack.c.bf16 %v924, %v922
        %v933 = vld [vmem:[%s7] sm:$0xf]
        %v934 = vld [vmem:[%s7 + $0x4] sm:$0xf]
        %v935 = vld [vmem:[%s7 + $0x8] sm:$0xf]
        %v936 = vld [vmem:[%s7 + $0xc] sm:$0xf]
        %v937 = vld [vmem:[%s7 + $0x10] sm:$0xf]
        %v938 = vld [vmem:[%s7 + $0x14] sm:$0xf]
        %v939 = vld [vmem:[%s7 + $0x18] sm:$0xf]
        %v940 = vld [vmem:[%s7 + $0x1c] sm:$0xf]
        %v941 = vld [vmem:[%s8] sm:$0xff]
        %v942 = vld [vmem:[%s8 + $0x8] sm:$0xff]
        %v943 = vld [vmem:[%s8 + $0x10] sm:$0xff]
        %v944 = vld [vmem:[%s8 + $0x18] sm:$0xff]
        %v945 = vld [vmem:[%s8 + $0x20] sm:$0xff]
        %v946 = vld [vmem:[%s8 + $0x28] sm:$0xff]
        %v947 = vld [vmem:[%s8 + $0x30] sm:$0xff]
        %v948 = vld [vmem:[%s8 + $0x38] sm:$0xff]
        %950 = vset.pattern.permute.xlu0 0
        %951 = vperm.xlu0 %950, %v941
        %v952 = vpop.permute.xlu0 %951
        %955 = vset.pattern.permute.xlu0 0
        %956 = vperm.xlu0 %955, %v942
        %v957 = vpop.permute.xlu0 %956
        %960 = vset.pattern.permute.xlu0 0
        %961 = vperm.xlu0 %960, %v943
        %v962 = vpop.permute.xlu0 %961
        %965 = vset.pattern.permute.xlu0 0
        %966 = vperm.xlu0 %965, %v944
        %v967 = vpop.permute.xlu0 %966
        %970 = vset.pattern.permute.xlu0 0
        %971 = vperm.xlu0 %970, %v945
        %v972 = vpop.permute.xlu0 %971
        %975 = vset.pattern.permute.xlu0 0
        %976 = vperm.xlu0 %975, %v946
        %v977 = vpop.permute.xlu0 %976
        %980 = vset.pattern.permute.xlu0 0
        %981 = vperm.xlu0 %980, %v947
        %v982 = vpop.permute.xlu0 %981
        %985 = vset.pattern.permute.xlu0 0
        %986 = vperm.xlu0 %985, %v948
        %v987 = vpop.permute.xlu0 %986
        %v997 = vunpack.c.l.b16 %v933
        %v998 = vunpack.c.l.b16 %v934
        %v999 = vunpack.c.l.b16 %v935
        %v1000 = vunpack.c.l.b16 %v936
        %v1001 = vunpack.c.l.b16 %v937
        %v1002 = vunpack.c.l.b16 %v938
        %v1003 = vunpack.c.l.b16 %v939
        %v1004 = vunpack.c.l.b16 %v940
        %v1005 = vpack.c.b16 %v998, %v997
        %v1006 = vpack.c.b16 %v1000, %v999
        %v1007 = vpack.c.b16 %v1002, %v1001
        %v1008 = vpack.c.b16 %v1004, %v1003
        %v1010 = vsel %vm838, %v1005, 0
        %v1013 = vsel %vm838, %v1006, 0
        %v1016 = vsel %vm838, %v1007, 0
        %v1019 = vsel %vm838, %v1008, 0
        %1021 = vmatpush.bf16.msra.mxu0 0
        %1022 = vmatpush.bf16.msra.mxu0 0
        %1023 = vmatpush.bf16.msra.mxu0 0
        %1024 = vmatpush.bf16.msra.mxu0 0
        %1025 = vmatpush.bf16.msra.mxu0 %v931
        %1026 = vmatpush.bf16.msra.mxu0 %v929
        %1027 = vmatpush.bf16.msra.mxu0 %v927
        %1028 = vmatpush.bf16.msra.mxu0 %v925
        %1029 = vmatmul.bf16.gmra.mxu0 %v1010
        %v1030 = vpop.f32.mrf.mxu0
        %v1031 = vadd.f32 %v952, %v1030
        %v1032 = vpop.f32.mrf.mxu0
        %v1033 = vadd.f32 %v957, %v1032
        %1034 = vmatmul.bf16.gmra.mxu0 %v1013
        %v1035 = vpop.f32.mrf.mxu0
        %v1036 = vadd.f32 %v962, %v1035
        %v1037 = vpop.f32.mrf.mxu0
        %v1038 = vadd.f32 %v967, %v1037
        %1039 = vmatmul.bf16.gmra.mxu0 %v1016
        %v1040 = vpop.f32.mrf.mxu0
        %v1041 = vadd.f32 %v972, %v1040
        %v1042 = vpop.f32.mrf.mxu0
        %v1043 = vadd.f32 %v977, %v1042
        %1044 = vmatmul.bf16.gmra.mxu0 %v1019
        %v1045 = vpop.f32.mrf.mxu0
        %v1046 = vadd.f32 %v982, %v1045
        %v1047 = vpop.f32.mrf.mxu0
        %v1048 = vadd.f32 %v987, %v1047
        %1049 = vdwg.mxu0
        %1050 = vmatpush.bf16.msra.mxu0 0
        %1051 = vmatpush.bf16.msra.mxu0 0
        %1052 = vmatpush.bf16.msra.mxu0 0
        %1053 = vmatpush.bf16.msra.mxu0 0
        %1054 = vmatpush.bf16.msra.mxu0 %v932
        %1055 = vmatpush.bf16.msra.mxu0 %v930
        %1056 = vmatpush.bf16.msra.mxu0 %v928
        %1057 = vmatpush.bf16.msra.mxu0 %v926
        %1058 = vmatmul.bf16.gmra.mxu0 %v1010
        %v1059 = vpop.f32.mrf.mxu0
        %v1060 = vadd.f32 %v952, %v1059
        %v1061 = vpop.f32.mrf.mxu0
        %v1062 = vadd.f32 %v957, %v1061
        %1063 = vmatmul.bf16.gmra.mxu0 %v1013
        %v1064 = vpop.f32.mrf.mxu0
        %v1065 = vadd.f32 %v962, %v1064
        %v1066 = vpop.f32.mrf.mxu0
        %v1067 = vadd.f32 %v967, %v1066
        %1068 = vmatmul.bf16.gmra.mxu0 %v1016
        %v1069 = vpop.f32.mrf.mxu0
        %v1070 = vadd.f32 %v972, %v1069
        %v1071 = vpop.f32.mrf.mxu0
        %v1072 = vadd.f32 %v977, %v1071
        %1073 = vmatmul.bf16.gmra.mxu0 %v1019
        %v1074 = vpop.f32.mrf.mxu0
        %v1075 = vadd.f32 %v982, %v1074
        %v1076 = vpop.f32.mrf.mxu0
        %v1077 = vadd.f32 %v987, %v1076
        %1078 = vdwg.mxu0
        %v1079 = vadd.f32 %v1031, %v738
        %v1080 = vadd.f32 %v1060, %v739
        %v1081 = vadd.f32 %v1033, %v740
        %v1082 = vadd.f32 %v1062, %v741
        %v1083 = vadd.f32 %v1036, %v742
        %v1084 = vadd.f32 %v1065, %v743
        %v1085 = vadd.f32 %v1038, %v744
        %v1086 = vadd.f32 %v1067, %v745
        %v1087 = vadd.f32 %v1041, %v746
        %v1088 = vadd.f32 %v1070, %v747
        %v1089 = vadd.f32 %v1043, %v748
        %v1090 = vadd.f32 %v1072, %v749
        %v1091 = vadd.f32 %v1046, %v750
        %v1092 = vadd.f32 %v1075, %v751
        %v1093 = vadd.f32 %v1048, %v752
        %v1094 = vadd.f32 %v1077, %v753
        %v1095 = vmax.f32 %v1079, 0.0
        %v1096 = vmax.f32 %v1080, 0.0
        %v1097 = vmax.f32 %v1081, 0.0
        %v1098 = vmax.f32 %v1082, 0.0
        %v1099 = vmax.f32 %v1083, 0.0
        %v1100 = vmax.f32 %v1084, 0.0
        %v1101 = vmax.f32 %v1085, 0.0
        %v1102 = vmax.f32 %v1086, 0.0
        %v1103 = vmax.f32 %v1087, 0.0
        %v1104 = vmax.f32 %v1088, 0.0
        %v1105 = vmax.f32 %v1089, 0.0
        %v1106 = vmax.f32 %v1090, 0.0
        %v1107 = vmax.f32 %v1091, 0.0
        %v1108 = vmax.f32 %v1092, 0.0
        %v1109 = vmax.f32 %v1093, 0.0
        %v1110 = vmax.f32 %v1094, 0.0
        %v1111 = vpack.c.bf16 %v1097, %v1095
        %v1112 = vpack.c.bf16 %v1098, %v1096
        %v1113 = vpack.c.bf16 %v1101, %v1099
        %v1114 = vpack.c.bf16 %v1102, %v1100
        %v1115 = vpack.c.bf16 %v1105, %v1103
        %v1116 = vpack.c.bf16 %v1106, %v1104
        %v1117 = vpack.c.bf16 %v1109, %v1107
        %v1118 = vpack.c.bf16 %v1110, %v1108
        %v1119 = vld [vmem:[%s9] sm:$0xf]
        %v1120 = vld [vmem:[%s9 + $0x4] sm:$0xf]
        %v1121 = vld [vmem:[%s9 + $0x8] sm:$0xf]
        %v1122 = vld [vmem:[%s9 + $0xc] sm:$0xf]
        %v1123 = vld [vmem:[%s9 + $0x10] sm:$0xf]
        %v1124 = vld [vmem:[%s9 + $0x14] sm:$0xf]
        %v1125 = vld [vmem:[%s9 + $0x18] sm:$0xf]
        %v1126 = vld [vmem:[%s9 + $0x1c] sm:$0xf]
        %v1127 = vld [vmem:[%s10] sm:$0xff]
        %v1128 = vld [vmem:[%s10 + $0x8] sm:$0xff]
        %v1129 = vld [vmem:[%s10 + $0x10] sm:$0xff]
        %v1130 = vld [vmem:[%s10 + $0x18] sm:$0xff]
        %v1131 = vld [vmem:[%s10 + $0x20] sm:$0xff]
        %v1132 = vld [vmem:[%s10 + $0x28] sm:$0xff]
        %v1133 = vld [vmem:[%s10 + $0x30] sm:$0xff]
        %v1134 = vld [vmem:[%s10 + $0x38] sm:$0xff]
        %1136 = vset.pattern.permute.xlu0 0
        %1137 = vperm.xlu0 %1136, %v1127
        %v1138 = vpop.permute.xlu0 %1137
        %1141 = vset.pattern.permute.xlu0 0
        %1142 = vperm.xlu0 %1141, %v1128
        %v1143 = vpop.permute.xlu0 %1142
        %1146 = vset.pattern.permute.xlu0 0
        %1147 = vperm.xlu0 %1146, %v1129
        %v1148 = vpop.permute.xlu0 %1147
        %1151 = vset.pattern.permute.xlu0 0
        %1152 = vperm.xlu0 %1151, %v1130
        %v1153 = vpop.permute.xlu0 %1152
        %1156 = vset.pattern.permute.xlu0 0
        %1157 = vperm.xlu0 %1156, %v1131
        %v1158 = vpop.permute.xlu0 %1157
        %1161 = vset.pattern.permute.xlu0 0
        %1162 = vperm.xlu0 %1161, %v1132
        %v1163 = vpop.permute.xlu0 %1162
        %1166 = vset.pattern.permute.xlu0 0
        %1167 = vperm.xlu0 %1166, %v1133
        %v1168 = vpop.permute.xlu0 %1167
        %1171 = vset.pattern.permute.xlu0 0
        %1172 = vperm.xlu0 %1171, %v1134
        %v1173 = vpop.permute.xlu0 %1172
        %v1183 = vunpack.c.l.b16 %v1119
        %v1184 = vunpack.c.l.b16 %v1120
        %v1185 = vunpack.c.l.b16 %v1121
        %v1186 = vunpack.c.l.b16 %v1122
        %v1187 = vunpack.c.l.b16 %v1123
        %v1188 = vunpack.c.l.b16 %v1124
        %v1189 = vunpack.c.l.b16 %v1125
        %v1190 = vunpack.c.l.b16 %v1126
        %v1191 = vpack.c.b16 %v1184, %v1183
        %v1192 = vpack.c.b16 %v1186, %v1185
        %v1193 = vpack.c.b16 %v1188, %v1187
        %v1194 = vpack.c.b16 %v1190, %v1189
        %v1196 = vsel %vm838, %v1191, 0
        %v1199 = vsel %vm838, %v1192, 0
        %v1202 = vsel %vm838, %v1193, 0
        %v1205 = vsel %vm838, %v1194, 0
        %1207 = vmatpush.bf16.msra.mxu0 0
        %1208 = vmatpush.bf16.msra.mxu0 0
        %1209 = vmatpush.bf16.msra.mxu0 0
        %1210 = vmatpush.bf16.msra.mxu0 0
        %1211 = vmatpush.bf16.msra.mxu0 %v1117
        %1212 = vmatpush.bf16.msra.mxu0 %v1115
        %1213 = vmatpush.bf16.msra.mxu0 %v1113
        %1214 = vmatpush.bf16.msra.mxu0 %v1111
        %1215 = vmatmul.bf16.gmra.mxu0 %v1196
        %v1216 = vpop.f32.mrf.mxu0
        %v1217 = vadd.f32 %v1138, %v1216
        %v1218 = vpop.f32.mrf.mxu0
        %v1219 = vadd.f32 %v1143, %v1218
        %1220 = vmatmul.bf16.gmra.mxu0 %v1199
        %v1221 = vpop.f32.mrf.mxu0
        %v1222 = vadd.f32 %v1148, %v1221
        %v1223 = vpop.f32.mrf.mxu0
        %v1224 = vadd.f32 %v1153, %v1223
        %1225 = vmatmul.bf16.gmra.mxu0 %v1202
        %v1226 = vpop.f32.mrf.mxu0
        %v1227 = vadd.f32 %v1158, %v1226
        %v1228 = vpop.f32.mrf.mxu0
        %v1229 = vadd.f32 %v1163, %v1228
        %1230 = vmatmul.bf16.gmra.mxu0 %v1205
        %v1231 = vpop.f32.mrf.mxu0
        %v1232 = vadd.f32 %v1168, %v1231
        %v1233 = vpop.f32.mrf.mxu0
        %v1234 = vadd.f32 %v1173, %v1233
        %1235 = vdwg.mxu0
        %1236 = vmatpush.bf16.msra.mxu0 0
        %1237 = vmatpush.bf16.msra.mxu0 0
        %1238 = vmatpush.bf16.msra.mxu0 0
        %1239 = vmatpush.bf16.msra.mxu0 0
        %1240 = vmatpush.bf16.msra.mxu0 %v1118
        %1241 = vmatpush.bf16.msra.mxu0 %v1116
        %1242 = vmatpush.bf16.msra.mxu0 %v1114
        %1243 = vmatpush.bf16.msra.mxu0 %v1112
        %1244 = vmatmul.bf16.gmra.mxu0 %v1196
        %v1245 = vpop.f32.mrf.mxu0
        %v1246 = vadd.f32 %v1138, %v1245
        %v1247 = vpop.f32.mrf.mxu0
        %v1248 = vadd.f32 %v1143, %v1247
        %1249 = vmatmul.bf16.gmra.mxu0 %v1199
        %v1250 = vpop.f32.mrf.mxu0
        %v1251 = vadd.f32 %v1148, %v1250
        %v1252 = vpop.f32.mrf.mxu0
        %v1253 = vadd.f32 %v1153, %v1252
        %1254 = vmatmul.bf16.gmra.mxu0 %v1202
        %v1255 = vpop.f32.mrf.mxu0
        %v1256 = vadd.f32 %v1158, %v1255
        %v1257 = vpop.f32.mrf.mxu0
        %v1258 = vadd.f32 %v1163, %v1257
        %1259 = vmatmul.bf16.gmra.mxu0 %v1205
        %v1260 = vpop.f32.mrf.mxu0
        %v1261 = vadd.f32 %v1168, %v1260
        %v1262 = vpop.f32.mrf.mxu0
        %v1263 = vadd.f32 %v1173, %v1262
        %1264 = vdwg.mxu0
        %v1265 = vmax.f32 %v1217, 0.0
        %v1266 = vmax.f32 %v1246, 0.0
        %v1267 = vmax.f32 %v1219, 0.0
        %v1268 = vmax.f32 %v1248, 0.0
        %v1269 = vmax.f32 %v1222, 0.0
        %v1270 = vmax.f32 %v1251, 0.0
        %v1271 = vmax.f32 %v1224, 0.0
        %v1272 = vmax.f32 %v1253, 0.0
        %v1273 = vmax.f32 %v1227, 0.0
        %v1274 = vmax.f32 %v1256, 0.0
        %v1275 = vmax.f32 %v1229, 0.0
        %v1276 = vmax.f32 %v1258, 0.0
        %v1277 = vmax.f32 %v1232, 0.0
        %v1278 = vmax.f32 %v1261, 0.0
        %v1279 = vmax.f32 %v1234, 0.0
        %v1280 = vmax.f32 %v1263, 0.0
        %v1281 = vpack.c.bf16 %v1267, %v1265
        %v1282 = vpack.c.bf16 %v1268, %v1266
        %v1283 = vpack.c.bf16 %v1271, %v1269
        %v1284 = vpack.c.bf16 %v1272, %v1270
        %v1285 = vpack.c.bf16 %v1275, %v1273
        %v1286 = vpack.c.bf16 %v1276, %v1274
        %v1287 = vpack.c.bf16 %v1279, %v1277
        %v1288 = vpack.c.bf16 %v1280, %v1278
        %v1289 = vld [vmem:[%s11] sm:$0xf]
        %v1291 = vsel %vm838, %v1289, 0
        %1293 = vmatpush.bf16.msra.mxu0 0
        %1294 = vmatpush.bf16.msra.mxu0 0
        %1295 = vmatpush.bf16.msra.mxu0 0
        %1296 = vmatpush.bf16.msra.mxu0 0
        %1297 = vmatpush.bf16.msra.mxu0 %v1287
        %1298 = vmatpush.bf16.msra.mxu0 %v1285
        %1299 = vmatpush.bf16.msra.mxu0 %v1283
        %1300 = vmatpush.bf16.msra.mxu0 %v1281
        %1301 = vmatmul.bf16.gmra.mxu0 %v1291
        %v1302 = vpop.f32.mrf.mxu0
        %v1303 = vadd.f32 0.0, %v1302
        %v1304 = vpop.f32.mrf.mxu0
        %1305 = vdwg.mxu0
        %1306 = vmatpush.bf16.msra.mxu0 0
        %1307 = vmatpush.bf16.msra.mxu0 0
        %1308 = vmatpush.bf16.msra.mxu0 0
        %1309 = vmatpush.bf16.msra.mxu0 0
        %1310 = vmatpush.bf16.msra.mxu0 %v1288
        %1311 = vmatpush.bf16.msra.mxu0 %v1286
        %1312 = vmatpush.bf16.msra.mxu0 %v1284
        %1313 = vmatpush.bf16.msra.mxu0 %v1282
        %1314 = vmatmul.bf16.gmra.mxu0 %v1291
        %v1315 = vpop.f32.mrf.mxu0
        %v1316 = vadd.f32 0.0, %v1315
        %v1317 = vpop.f32.mrf.mxu0
        %1318 = vdwg.mxu0
        %v1319 = vld [vmem:[#allocation2] sm:$0x1]
        %1321 = vset.pattern.permute.xlu0 0
        %1322 = vperm.xlu0 %1321, %v1319
        %v1323 = vpop.permute.xlu0 %1322
        %v1325 = vperm.slane %v1323, 0
        %v1326 = vadd.f32 %v1303, %v1325
        %v1327 = vadd.f32 %v1316, %v1325
        %v1328 = vmax.f32 %v1326, -400.0
        %v1329 = vmax.f32 %v1327, -400.0
        %v1330 = vmin.f32 %v1328, 400.0
        %v1331 = vmin.f32 %v1329, 400.0
        %v1334 = vrot.slane %v1331, 7
        %vm1335 = vcmask 1040384
        %v1336 = vsel %vm1335, %v1330, %v1334
        %v1338 = vlaneseq
        %vm1339 = vcmp.ge.s32.totalorder %v1338, 0
        %vm1340 = vcmp.lt.s32.totalorder %v1338, 256
        %vm1341 = vmand %vm1339, %vm1340
        %1342 = vst.msk [vmem:[%s481] sm:$0x3] %vm1341, %v1336
        %s1343 = smul.u32 2, %s26
        %p1344 = scmp.lt.s32.totalorder %s1343, 3
        %s1345 = scalar_select %p1344, %s1343, 3
        %s1346 = scalar_lea.vmem %s13, %s1345
        // Predicated region
        $region111: #{cnn1_forward.1} parent=105 // pred_check
          %p1347 = pneg %p322
        $region112: #{cnn1_forward.1} parent=105 // pred_check_branch
          %1349 = sbr.rel (%p1347) target = $region114
        $region113: #{cnn1_forward.1} parent=105 // pred_region
          %s1350 = smul.u32 2, %s26
        $region114: #{cnn1_forward.1} parent=105 // pred_fallthru
          _
      $region106: #{cnn1_forward.1} parent=5 // pred_fallthru
        _
      %p1351 = scmp.le.s32.totalorder 2, %s21
      // Predicated region
      $region115: #{cnn1_forward.1} parent=5 // pred_check
        %p1352 = pneg %p1351
      $region116: #{cnn1_forward.1} parent=5 // pred_check_branch
        %1354 = sbr.rel (%p1352) target = $region118
      $region117: #{cnn1_forward.1} parent=5 // pred_region
        %s1355 = ssub.s32 %s21, 2
        // Predicated region
        $region119: #{cnn1_forward.1} parent=117 // pred_check
          %p1356 = pneg %p328
        $region120: #{cnn1_forward.1} parent=117 // pred_check_branch
          %1358 = sbr.rel (%p1356) target = $region122
        $region121: #{cnn1_forward.1} parent=117 // pred_region
          %s1359 = smul.u32 2, %s27
          %p1360 = scmp.lt.s32.totalorder %s1359, 3
          %s1361 = scalar_select %p1360, %s1359, 3
          %s1362 = scalar_lea.vmem %s13, %s1361
        $region122: #{cnn1_forward.1} parent=117 // pred_fallthru
          _
      $region118: #{cnn1_forward.1} parent=5 // pred_fallthru
        _
    $region6: #{cnn1_forward.1} parent=1 // loop_footer
      %s25 = sadd.s32 1, %s21
    $region7: #{cnn1_forward.1} parent=1 // loop_footer_branch
      %20 = sbr.rel target = $region3
    $region8: #{cnn1_forward.1} parent=1 // loop_exit
      _

</llo_original>
